<compile_context>
chip_gen: v7x
topology: tpu7x:2x2x1
jax: 0.10.0
libtpu: 0.0.40
codegen_flags: <defaults>
</compile_context>

<pallas_src>
import functools

import jax
import jax.numpy as jnp
from jax.experimental import pallas as pl
from jax.experimental.pallas import tpu as pltpu

DEGREE = 1.0  # self.degree = 1 in the module


def _bert_graph_kernel(h_ref, ct_ref, cn_ref, w1_ref, b1_ref, w2_ref, b2_ref,
                       cls_ref, q_ref, feat_ref, acc_ref,
                       *, seq_len: int, num_labels: int):
    s = pl.program_id(1)
    last_s = pl.num_programs(1) - 1

    # Streamed hidden tile; cast to f32 BEFORE accumulating (bf16-safe on v5e).
    h = h_ref[...].astype(jnp.float32)                  # (tb, ts, H)

    # Token 0 is excluded from the mean; it always lives in S-tile 0.
    @pl.when(s == 0)
    def _init():
        acc_ref[...] = -h[:, 0, :]

    acc_ref[...] = acc_ref[...] + jnp.sum(h, axis=1)    # (tb, H)

    @pl.when(s == last_s)
    def _epilogue():
        # ---- runs once per batch tile ----
        inv_tokens = 1.0 / float(seq_len - 1)
        cls = acc_ref[...] * inv_tokens                 # (tb, H) f32
        cls_ref[...] = cls

        # q = 1/(1 + ||cls - c||^2 / degree) via ||a||^2 + ||c||^2 - 2 a.c (MXU).
        # cluster is pre-transposed to (H, Kp): no relayout on the epilogue path.
        # NOTE: the expansion is cancellation-prone if cls is very close to a
        # center; sq is clamped at 0 and the cross term is kept in f32.
        cls_sq = jnp.sum(cls * cls, axis=1, keepdims=True)              # (tb, 1)
        cross = jnp.dot(cls, ct_ref[...],
                        preferred_element_type=jnp.float32)             # (tb, Kp)
        sq = jnp.maximum(cls_sq + cn_ref[...] - 2.0 * cross, 0.0)

        # EUP approximate reciprocal instead of a VALU divide.
        q = pl.reciprocal(1.0 + sq * (1.0 / DEGREE), approx=True)
        alpha = (DEGREE + 1.0) / 2.0
        if alpha != 1.0:                                # trace-time branch (degree=1 -> skip)
            q = q ** alpha
        kp = q.shape[-1]
        if num_labels < kp:                             # mask zero-padded cluster lanes
            col = jax.lax.broadcasted_iota(jnp.int32, q.shape, 1)
            q = jnp.where(col < num_labels, q, 0.0)
        q_ref[...] = q * pl.reciprocal(jnp.sum(q, axis=1, keepdims=True),
                                       approx=True)

        # projection: Linear(H,H) -> ReLU -> (Dropout: identity) -> Linear(H,256)
        z = jnp.dot(cls, w1_ref[...], preferred_element_type=jnp.float32) + b1_ref[...]
        z = jnp.maximum(z, 0.0)
        feat_ref[...] = (jnp.dot(z, w2_ref[...], preferred_element_type=jnp.float32)
                         + b2_ref[...])


def _vmem_capacity_bytes() -> int:
    """Per-TensorCore VMEM capacity; conservative (v7x) fallback if unknown."""
    try:
        info = pltpu.get_tpu_info()
        for attr in ("vmem_capacity_bytes", "vmem_bytes", "vmem_size_bytes"):
            v = getattr(info, attr, None)
            if v:
                return int(v)
    except Exception:
        pass
    return 64 << 20


def _pick_block_b(B: int) -> int:
    if B % 8 != 0:
        return B                       # must be a multiple of 8 or the full dim
    target = min(256, B)               # large M for the epilogue MXU matmuls
    if B >= 16:
        target = min(target, B // 2)   # >= 2 batch tiles so both v7x cores get work
    target -= target % 8
    for cand in range(max(target, 8), 7, -8):
        if B % cand == 0:
            return cand
    return 8


def _pick_block_s(S: int, block_b: int, H: int, itemsize: int,
                  stream_budget: int) -> int:
    sub = 8 * (4 // itemsize)          # sublane multiple: f32 -> 8, bf16 -> 16
    cands = sorted({S} | {c for c in range(sub, S + 1, sub) if S % c == 0},
                   reverse=True)
    for c in cands:                    # largest block_s whose double buffer fits
        if 2 * block_b * c * H * itemsize <= stream_budget:
            return c
    return cands[-1]


def bert_for_graph_forward(hidden_states, cluster, w1, b1, w2, b2,
                           *, block_b=None, block_s=None):
    """hidden_states:(B,S,H) f32/bf16; cluster:(K,H); w1:(H,H); b1:(1,H); w2:(H,P); b2:(1,P)."""
    B, S, H = hidden_states.shape
    K = cluster.shape[0]
    P = w2.shape[1]
    if S < 2:
        raise ValueError("sequence length must be >= 2 (token 0 is dropped from the mean)")

    itemsize = jnp.dtype(hidden_states.dtype).itemsize

    # Lane-dense q output: pad the cluster axis up to a multiple of 128 and
    # pre-transpose to (H, Kp) so the epilogue contraction needs no relayout.
    Kp = max(128, ((K + 127) // 128) * 128)
    cluster32 = cluster.astype(jnp.float32)
    if Kp != K:
        cluster_p = jnp.zeros((Kp, H), jnp.float32).at[:K, :].set(cluster32)
    else:
        cluster_p = cluster32
    cluster_t = cluster_p.T                                     # (H, Kp)
    c_norm = jnp.sum(cluster_p * cluster_p, axis=1)[None, :]    # (1, Kp), exact f32

    # --- generation-aware VMEM budgeting (v7x has only 64 MiB / TC) ---
    vmem_cap = _vmem_capacity_bytes()
    vmem_budget = min(int(0.85 * vmem_cap), 96 << 20)

    resident_bytes = 4 * (H * Kp + Kp + H * H + H + H * P + P)  # single-buffered residents
    out_acc_bytes_per_row = 4 * (2 * (H + Kp + P) + H)          # dbl-buffered outs + scratch
    margin = 8 << 20

    if block_b is None:
        block_b = _pick_block_b(B)
    if block_s is None:
        stream_budget = (vmem_budget - resident_bytes
                         - block_b * out_acc_bytes_per_row - margin)
        block_s = _pick_block_s(S, block_b, H, itemsize, stream_budget)
    assert B % block_b == 0 and S % block_s == 0

    n_b, n_s = B // block_b, S // block_s
    kernel = functools.partial(_bert_graph_kernel, seq_len=S, num_labels=K)

    needed = (2 * block_b * block_s * H * itemsize   # double-buffered hidden stream
              + resident_bytes                       # residents (1x with Buffered(1))
              + block_b * out_acc_bytes_per_row)     # outputs + accumulator scratch
    vmem_limit = int(min(max(needed + margin, 32 << 20), vmem_budget))

    cost = pl.CostEstimate(
        flops=2 * B * H * (H + P + Kp) + 2 * B * S * H,
        transcendentals=0,
        bytes_accessed=(itemsize * B * S * H
                        + 4 * (H * Kp + Kp + H * H + H + H * P + P
                               + B * H + B * Kp + B * P)))

    grid = (n_b, n_s)
    out_shape = (jax.ShapeDtypeStruct((B, H), jnp.float32),
                 jax.ShapeDtypeStruct((B, Kp), jnp.float32),
                 jax.ShapeDtypeStruct((B, P), jnp.float32))
    out_specs = [
        pl.BlockSpec((block_b, H), lambda b, s: (b, 0)),
        pl.BlockSpec((block_b, Kp), lambda b, s: (b, 0)),
        pl.BlockSpec((block_b, P), lambda b, s: (b, 0)),
    ]
    scratch_shapes = [pltpu.VMEM((block_b, H), jnp.float32)]
    compiler_params = pltpu.CompilerParams(
        dimension_semantics=("parallel", "arbitrary"),
        vmem_limit_bytes=vmem_limit)

    def build(single_buffer_residents: bool):
        if single_buffer_residents:
            def resident(shape):
                # Constant index_map -> the second pipeline buffer is dead weight.
                return pl.BlockSpec(shape, lambda b, s: (0, 0),
                                    pipeline_mode=pl.Buffered(1))
        else:
            def resident(shape):
                return pl.BlockSpec(shape, lambda b, s: (0, 0))
        in_specs = [
            pl.BlockSpec((block_b, block_s, H), lambda b, s: (b, s, 0)),  # streamed
            resident((H, Kp)),    # cluster^T  (resident)
            resident((1, Kp)),    # ||c||^2    (resident)
            resident((H, H)),     # w1         (resident)
            resident((1, H)),     # b1         (resident)
            resident((H, P)),     # w2         (resident)
            resident((1, P)),     # b2         (resident)
        ]
        return pl.pallas_call(
            kernel, grid=grid, in_specs=in_specs, out_specs=out_specs,
            out_shape=out_shape, scratch_shapes=scratch_shapes,
            compiler_params=compiler_params, cost_estimate=cost)

    args = (hidden_states, cluster_t, c_norm, w1, b1, w2, b2)
    try:
        cls_out, q_pad, feat = build(True)(*args)    # single-buffered residents
    except Exception:
        cls_out, q_pad, feat = build(False)(*args)   # safe fallback: default buffering

    return cls_out, q_pad[:, :K], feat


def reference_forward(hidden_states, cluster, w1, b1, w2, b2):
    h = hidden_states.astype(jnp.float32)
    cls = jnp.mean(h[:, 1:, :], axis=1)
    sq = jnp.sum((cls[:, None, :] - cluster[None, :, :]) ** 2, axis=2)
    q = 1.0 / (1.0 + sq / DEGREE)
    q = q ** ((DEGREE + 1.0) / 2.0)
    q = q / jnp.sum(q, axis=1, keepdims=True)
    z = jnp.maximum(cls @ w1 + b1, 0.0)
    feat = z @ w2 + b2
    return cls, q, feat


def _make_inputs(key, B, S, H, K, P):
    k_h, k_c, k_w1, k_b1, k_w2, k_b2 = jax.random.split(key, 6)
    hidden_states = jax.random.normal(k_h, (B, S, H), dtype=jnp.float32)
    cluster = jax.random.normal(k_c, (K, H), dtype=jnp.float32)          # cluster_layer
    w1 = jax.random.normal(k_w1, (H, H), dtype=jnp.float32) * 0.05       # Linear(H,H)
    b1 = jax.random.normal(k_b1, (1, H), dtype=jnp.float32) * 0.05
    w2 = jax.random.normal(k_w2, (H, P), dtype=jnp.float32) * 0.05       # Linear(H,256)
    b2 = jax.random.normal(k_b2, (1, P), dtype=jnp.float32) * 0.05
    return hidden_states, cluster, w1, b1, w2, b2


def _check(args, **kw):
    cls_out, q_out, feat_out = jax.block_until_ready(
        bert_for_graph_forward(*args, **kw))
    cls_r, q_r, feat_r = reference_forward(*args)
    assert jnp.allclose(cls_out, cls_r, atol=1e-5, rtol=1e-5)
    # slack on q for the MXU ||a-c||^2 identity + EUP approximate reciprocals
    assert jnp.allclose(q_out, q_r, atol=2e-3, rtol=2e-3)
    assert jnp.allclose(feat_out, feat_r, atol=2e-4, rtol=2e-4)


if __name__ == "__main__":
    key = jax.random.PRNGKey(0)
    k1, k2, k3 = jax.random.split(key, 3)

    # 1) small shapes consistent with the forward pass (single-tile path)
    B, S, H, K, P = 2, 8, 32, 4, 256     # batch, seq, hidden, num_labels, proj-out
    _check(_make_inputs(k1, B, S, H, K, P))

    # 2) multi-tile path: several S tiles (streaming reduction) + several B tiles
    B, S, H, K, P = 16, 24, 32, 4, 256
    _check(_make_inputs(k2, B, S, H, K, P), block_b=8, block_s=8)

    # 3) bf16 hidden-state stream (halves HBM bytes), auto tile selection
    B, S, H, K, P = 16, 32, 64, 5, 256
    args = _make_inputs(k3, B, S, H, K, P)
    args = (args[0].astype(jnp.bfloat16),) + args[1:]
    _check(args)

    print("KERNEL_OK")
</pallas_src>

<mosaic_0001>
module attributes {stable_mosaic.version = 11 : i64} {
  func.func @_bert_graph_kernel(%arg0: i32, %arg1: i32, %arg2: memref<2x8x32xf32, #tpu.memory_space<vmem>>, %arg3: memref<32x128xf32, #tpu.memory_space<vmem>>, %arg4: memref<1x128xf32, #tpu.memory_space<vmem>>, %arg5: memref<32x32xf32, #tpu.memory_space<vmem>>, %arg6: memref<1x32xf32, #tpu.memory_space<vmem>>, %arg7: memref<32x256xf32, #tpu.memory_space<vmem>>, %arg8: memref<1x256xf32, #tpu.memory_space<vmem>>, %arg9: memref<2x32xf32, #tpu.memory_space<vmem>>, %arg10: memref<2x128xf32, #tpu.memory_space<vmem>>, %arg11: memref<2x256xf32, #tpu.memory_space<vmem>>, %arg12: memref<2x32xf32, #tpu.memory_space<vmem>>) attributes {dimension_semantics = [#tpu.dimension_semantics<parallel>, #tpu.dimension_semantics<arbitrary>], iteration_bounds = array<i64: 1, 1>, scalar_prefetch = 0 : i64, scratch_operands = 1 : i64, tpu.core_type = #tpu.core_type<tc>, window_params = [{transform_indices = @transform_0, window_bounds = array<i64: 2, 8, 32>}, {pipeline_mode = #tpu.pipeline_mode<synchronous>, transform_indices = @transform_1, window_bounds = array<i64: 32, 128>}, {pipeline_mode = #tpu.pipeline_mode<synchronous>, transform_indices = @transform_2, window_bounds = array<i64: 1, 128>}, {pipeline_mode = #tpu.pipeline_mode<synchronous>, transform_indices = @transform_3, window_bounds = array<i64: 32, 32>}, {pipeline_mode = #tpu.pipeline_mode<synchronous>, transform_indices = @transform_4, window_bounds = array<i64: 1, 32>}, {pipeline_mode = #tpu.pipeline_mode<synchronous>, transform_indices = @transform_5, window_bounds = array<i64: 32, 256>}, {pipeline_mode = #tpu.pipeline_mode<synchronous>, transform_indices = @transform_6, window_bounds = array<i64: 1, 256>}, {transform_indices = @transform_7, window_bounds = array<i64: 2, 32>}, {transform_indices = @transform_8, window_bounds = array<i64: 2, 128>}, {transform_indices = @transform_9, window_bounds = array<i64: 2, 256>}]} {
    %c0 = arith.constant 0 : index
    %c0_0 = arith.constant 0 : index
    %c0_1 = arith.constant 0 : index
    %0 = vector.load %arg2[%c0, %c0_0, %c0_1] : memref<2x8x32xf32, #tpu.memory_space<vmem>>, vector<2x8x32xf32>
    %c0_i32 = arith.constant 0 : i32
    %1 = arith.cmpi eq, %arg1, %c0_i32 : i32
    %2 = arith.extui %1 : i1 to i32
    %c0_i32_2 = arith.constant 0 : i32
    %3 = arith.cmpi ne, %2, %c0_i32_2 : i32
    scf.if %3 {
      %11 = vector.extract_strided_slice %0 {offsets = [0, 0, 0], sizes = [2, 1, 32], strides = [1, 1, 1]} : vector<2x8x32xf32> to vector<2x1x32xf32>
      %12 = vector.shape_cast %11 : vector<2x1x32xf32> to vector<2x32xf32>
      %cst_9 = arith.constant 0.000000e+00 : f32
      %13 = vector.broadcast %cst_9 : f32 to vector<2x32xf32>
      %14 = arith.subf %13, %12 : vector<2x32xf32>
      %c0_10 = arith.constant 0 : index
      %c0_11 = arith.constant 0 : index
      %15 = vector.load %arg12[%c0_10, %c0_11] : memref<2x32xf32, #tpu.memory_space<vmem>>, vector<2x32xf32>
      tpu.vector_store %arg12[%c0_10, %c0_11], %14 {strides = array<i32>} : memref<2x32xf32, #tpu.memory_space<vmem>>, vector<2x32xf32>,
    } else {
    }
    %c0_3 = arith.constant 0 : index
    %c0_4 = arith.constant 0 : index
    %4 = vector.load %arg12[%c0_3, %c0_4] : memref<2x32xf32, #tpu.memory_space<vmem>>, vector<2x32xf32>
    %cst = arith.constant dense<0.000000e+00> : vector<2x32xf32>
    %5 = vector.multi_reduction <add>, %0, %cst [1] : vector<2x8x32xf32> to vector<2x32xf32>
    %6 = arith.addf %4, %5 : vector<2x32xf32>
    %c0_5 = arith.constant 0 : index
    %c0_6 = arith.constant 0 : index
    %7 = vector.load %arg12[%c0_5, %c0_6] : memref<2x32xf32, #tpu.memory_space<vmem>>, vector<2x32xf32>
    tpu.vector_store %arg12[%c0_5, %c0_6], %6 {strides = array<i32>} : memref<2x32xf32, #tpu.memory_space<vmem>>, vector<2x32xf32>,
    %c0_i32_7 = arith.constant 0 : i32
    %8 = arith.cmpi eq, %arg1, %c0_i32_7 : i32
    %9 = arith.extui %8 : i1 to i32
    %c0_i32_8 = arith.constant 0 : i32
    %10 = arith.cmpi ne, %9, %c0_i32_8 : i32
    scf.if %10 {
      %c0_9 = arith.constant 0 : index
      %c0_10 = arith.constant 0 : index
      %11 = vector.load %arg12[%c0_9, %c0_10] : memref<2x32xf32, #tpu.memory_space<vmem>>, vector<2x32xf32>
      %cst_11 = arith.constant 0.142857149 : f32
      %12 = vector.broadcast %cst_11 : f32 to vector<2x32xf32>
      %13 = arith.mulf %11, %12 : vector<2x32xf32>
      %c0_12 = arith.constant 0 : index
      %c0_13 = arith.constant 0 : index
      %14 = vector.load %arg9[%c0_12, %c0_13] : memref<2x32xf32, #tpu.memory_space<vmem>>, vector<2x32xf32>
      tpu.vector_store %arg9[%c0_12, %c0_13], %13 {strides = array<i32>} : memref<2x32xf32, #tpu.memory_space<vmem>>, vector<2x32xf32>,
      %15 = arith.mulf %13, %13 : vector<2x32xf32>
      %cst_14 = arith.constant dense<0.000000e+00> : vector<2xf32>
      %16 = vector.multi_reduction <add>, %15, %cst_14 [1] : vector<2x32xf32> to vector<2xf32>
      %17 = vector.shape_cast %16 : vector<2xf32> to vector<2x1xf32>
      %c0_15 = arith.constant 0 : index
      %c0_16 = arith.constant 0 : index
      %18 = vector.load %arg3[%c0_15, %c0_16] : memref<32x128xf32, #tpu.memory_space<vmem>>, vector<32x128xf32>
      %cst_17 = arith.constant dense<0.000000e+00> : vector<2x128xf32>
      %19 = tpu.matmul %13, %18, %cst_17 {dimension_numbers = #tpu.dot_dimension_numbers<[1], [0], [0], [1], [0, 0, 1, 1], [], []>} : vector<2x32xf32>, vector<32x128xf32>, vector<2x128xf32> -> vector<2x128xf32>
      %c0_18 = arith.constant 0 : index
      %c0_19 = arith.constant 0 : index
      %20 = vector.load %arg4[%c0_18, %c0_19] : memref<1x128xf32, #tpu.memory_space<vmem>>, vector<1x128xf32>
      %21 = vector.broadcast %17 : vector<2x1xf32> to vector<2x128xf32>
      %22 = vector.broadcast %20 : vector<1x128xf32> to vector<2x128xf32>
      %23 = arith.addf %21, %22 : vector<2x128xf32>
      %cst_20 = arith.constant 2.000000e+00 : f32
      %24 = vector.broadcast %cst_20 : f32 to vector<2x128xf32>
      %25 = arith.mulf %24, %19 : vector<2x128xf32>
      %26 = arith.subf %23, %25 : vector<2x128xf32>
      %cst_21 = arith.constant 0.000000e+00 : f32
      %27 = vector.broadcast %cst_21 : f32 to vector<2x128xf32>
      %28 = arith.maximumf %26, %27 : vector<2x128xf32>
      %cst_22 = arith.constant 1.000000e+00 : f32
      %29 = vector.broadcast %cst_22 : f32 to vector<2x128xf32>
      %30 = arith.mulf %28, %29 : vector<2x128xf32>
      %cst_23 = arith.constant 1.000000e+00 : f32
      %31 = vector.broadcast %cst_23 : f32 to vector<2x128xf32>
      %32 = arith.addf %31, %30 : vector<2x128xf32>
      %33 = tpu.reciprocal %32 {approx = true} : vector<2x128xf32> -> vector<2x128xf32>
      %34 = tpu.iota {dimensions = array<i32: 1>} : vector<2x128xi32>
      %c4_i32 = arith.constant 4 : i32
      %35 = vector.broadcast %c4_i32 : i32 to vector<2x128xi32>
      %36 = arith.cmpi slt, %34, %35 : vector<2x128xi32>
      %cst_24 = arith.constant 0.000000e+00 : f32
      %37 = vector.broadcast %cst_24 : f32 to vector<2x128xf32>
      %38 = arith.select %36, %33, %37 : vector<2x128xi1>, vector<2x128xf32>
      %cst_25 = arith.constant dense<0.000000e+00> : vector<2xf32>
      %39 = vector.multi_reduction <add>, %38, %cst_25 [1] : vector<2x128xf32> to vector<2xf32>
      %40 = vector.shape_cast %39 : vector<2xf32> to vector<2x1xf32>
      %41 = tpu.reciprocal %40 {approx = true} : vector<2x1xf32> -> vector<2x1xf32>
      %42 = vector.broadcast %41 : vector<2x1xf32> to vector<2x128xf32>
      %43 = arith.mulf %38, %42 : vector<2x128xf32>
      %c0_26 = arith.constant 0 : index
      %c0_27 = arith.constant 0 : index
      %44 = vector.load %arg10[%c0_26, %c0_27] : memref<2x128xf32, #tpu.memory_space<vmem>>, vector<2x128xf32>
      tpu.vector_store %arg10[%c0_26, %c0_27], %43 {strides = array<i32>} : memref<2x128xf32, #tpu.memory_space<vmem>>, vector<2x128xf32>,
      %c0_28 = arith.constant 0 : index
      %c0_29 = arith.constant 0 : index
      %45 = vector.load %arg5[%c0_28, %c0_29] : memref<32x32xf32, #tpu.memory_space<vmem>>, vector<32x32xf32>
      %cst_30 = arith.constant dense<0.000000e+00> : vector<2x32xf32>
      %46 = tpu.matmul %13, %45, %cst_30 {dimension_numbers = #tpu.dot_dimension_numbers<[1], [0], [0], [1], [0, 0, 1, 1], [], []>} : vector<2x32xf32>, vector<32x32xf32>, vector<2x32xf32> -> vector<2x32xf32>
      %c0_31 = arith.constant 0 : index
      %c0_32 = arith.constant 0 : index
      %47 = vector.load %arg6[%c0_31, %c0_32] : memref<1x32xf32, #tpu.memory_space<vmem>>, vector<1x32xf32>
      %48 = vector.broadcast %47 : vector<1x32xf32> to vector<2x32xf32>
      %49 = arith.addf %46, %48 : vector<2x32xf32>
      %cst_33 = arith.constant 0.000000e+00 : f32
      %50 = vector.broadcast %cst_33 : f32 to vector<2x32xf32>
      %51 = arith.maximumf %49, %50 : vector<2x32xf32>
      %c0_34 = arith.constant 0 : index
      %c0_35 = arith.constant 0 : index
      %52 = vector.load %arg7[%c0_34, %c0_35] : memref<32x256xf32, #tpu.memory_space<vmem>>, vector<32x256xf32>
      %cst_36 = arith.constant dense<0.000000e+00> : vector<2x256xf32>
      %53 = tpu.matmul %51, %52, %cst_36 {dimension_numbers = #tpu.dot_dimension_numbers<[1], [0], [0], [1], [0, 0, 1, 1], [], []>} : vector<2x32xf32>, vector<32x256xf32>, vector<2x256xf32> -> vector<2x256xf32>
      %c0_37 = arith.constant 0 : index
      %c0_38 = arith.constant 0 : index
      %54 = vector.load %arg8[%c0_37, %c0_38] : memref<1x256xf32, #tpu.memory_space<vmem>>, vector<1x256xf32>
      %55 = vector.broadcast %54 : vector<1x256xf32> to vector<2x256xf32>
      %56 = arith.addf %53, %55 : vector<2x256xf32>
      %c0_39 = arith.constant 0 : index
      %c0_40 = arith.constant 0 : index
      %57 = vector.load %arg11[%c0_39, %c0_40] : memref<2x256xf32, #tpu.memory_space<vmem>>, vector<2x256xf32>
      tpu.vector_store %arg11[%c0_39, %c0_40], %56 {strides = array<i32>} : memref<2x256xf32, #tpu.memory_space<vmem>>, vector<2x256xf32>,
    } else {
    }
    return
  }
  func.func @transform_0(%arg0: i32, %arg1: i32) -> (i32, i32, i32) {
    %c0_i32 = arith.constant 0 : i32
    %c0_i32_0 = arith.constant 0 : i32
    return %arg0, %arg1, %c0_i32 : i32, i32, i32
  }
  func.func @transform_1(%arg0: i32, %arg1: i32) -> (i32, i32) {
    %c0_i32 = arith.constant 0 : i32
    %c0_i32_0 = arith.constant 0 : i32
    %c0_i32_1 = arith.constant 0 : i32
    return %c0_i32, %c0_i32_0 : i32, i32
  }
  func.func @transform_2(%arg0: i32, %arg1: i32) -> (i32, i32) {
    %c0_i32 = arith.constant 0 : i32
    %c0_i32_0 = arith.constant 0 : i32
    %c0_i32_1 = arith.constant 0 : i32
    return %c0_i32, %c0_i32_0 : i32, i32
  }
  func.func @transform_3(%arg0: i32, %arg1: i32) -> (i32, i32) {
    %c0_i32 = arith.constant 0 : i32
    %c0_i32_0 = arith.constant 0 : i32
    %c0_i32_1 = arith.constant 0 : i32
    return %c0_i32, %c0_i32_0 : i32, i32
  }
  func.func @transform_4(%arg0: i32, %arg1: i32) -> (i32, i32) {
    %c0_i32 = arith.constant 0 : i32
    %c0_i32_0 = arith.constant 0 : i32
    %c0_i32_1 = arith.constant 0 : i32
    return %c0_i32, %c0_i32_0 : i32, i32
  }
  func.func @transform_5(%arg0: i32, %arg1: i32) -> (i32, i32) {
    %c0_i32 = arith.constant 0 : i32
    %c0_i32_0 = arith.constant 0 : i32
    %c0_i32_1 = arith.constant 0 : i32
    return %c0_i32, %c0_i32_0 : i32, i32
  }
  func.func @transform_6(%arg0: i32, %arg1: i32) -> (i32, i32) {
    %c0_i32 = arith.constant 0 : i32
    %c0_i32_0 = arith.constant 0 : i32
    %c0_i32_1 = arith.constant 0 : i32
    return %c0_i32, %c0_i32_0 : i32, i32
  }
  func.func @transform_7(%arg0: i32, %arg1: i32) -> (i32, i32) {
    %c0_i32 = arith.constant 0 : i32
    %c0_i32_0 = arith.constant 0 : i32
    return %arg0, %c0_i32 : i32, i32
  }
  func.func @transform_8(%arg0: i32, %arg1: i32) -> (i32, i32) {
    %c0_i32 = arith.constant 0 : i32
    %c0_i32_0 = arith.constant 0 : i32
    return %arg0, %c0_i32 : i32, i32
  }
  func.func @transform_9(%arg0: i32, %arg1: i32) -> (i32, i32) {
    %c0_i32 = arith.constant 0 : i32
    %c0_i32_0 = arith.constant 0 : i32
    return %arg0, %c0_i32 : i32, i32
  }
}

module attributes {stable_mosaic.version = 11 : i64} {
  func.func @_bert_graph_kernel(%arg0: i32, %arg1: i32, %arg2: memref<2x8x32xf32, #tpu.memory_space<vmem>>, %arg3: memref<32x128xf32, #tpu.memory_space<vmem>>, %arg4: memref<1x128xf32, #tpu.memory_space<vmem>>, %arg5: memref<32x32xf32, #tpu.memory_space<vmem>>, %arg6: memref<1x32xf32, #tpu.memory_space<vmem>>, %arg7: memref<32x256xf32, #tpu.memory_space<vmem>>, %arg8: memref<1x256xf32, #tpu.memory_space<vmem>>, %arg9: memref<2x32xf32, #tpu.memory_space<vmem>>, %arg10: memref<2x128xf32, #tpu.memory_space<vmem>>, %arg11: memref<2x256xf32, #tpu.memory_space<vmem>>, %arg12: memref<2x32xf32, #tpu.memory_space<vmem>>) attributes {dimension_semantics = [#tpu.dimension_semantics<parallel>, #tpu.dimension_semantics<arbitrary>], iteration_bounds = array<i64: 1, 1>, scalar_prefetch = 0 : i64, scratch_operands = 1 : i64, tpu.core_type = #tpu.core_type<tc>, window_params = [{transform_indices = @transform_0, window_bounds = array<i64: 2, 8, 32>}, {pipeline_mode = #tpu.pipeline_mode<synchronous>, transform_indices = @transform_1, window_bounds = array<i64: 32, 128>}, {pipeline_mode = #tpu.pipeline_mode<synchronous>, transform_indices = @transform_2, window_bounds = array<i64: 1, 128>}, {pipeline_mode = #tpu.pipeline_mode<synchronous>, transform_indices = @transform_3, window_bounds = array<i64: 32, 32>}, {pipeline_mode = #tpu.pipeline_mode<synchronous>, transform_indices = @transform_4, window_bounds = array<i64: 1, 32>}, {pipeline_mode = #tpu.pipeline_mode<synchronous>, transform_indices = @transform_5, window_bounds = array<i64: 32, 256>}, {pipeline_mode = #tpu.pipeline_mode<synchronous>, transform_indices = @transform_6, window_bounds = array<i64: 1, 256>}, {transform_indices = @transform_7, window_bounds = array<i64: 2, 32>}, {transform_indices = @transform_8, window_bounds = array<i64: 2, 128>}, {transform_indices = @transform_9, window_bounds = array<i64: 2, 256>}]} {
    %c0 = arith.constant 0 : index
    %c0_0 = arith.constant 0 : index
    %c0_1 = arith.constant 0 : index
    %0 = vector.load %arg2[%c0, %c0_0, %c0_1] : memref<2x8x32xf32, #tpu.memory_space<vmem>>, vector<2x8x32xf32>
    %c0_i32 = arith.constant 0 : i32
    %1 = arith.cmpi eq, %arg1, %c0_i32 : i32
    %2 = arith.extui %1 : i1 to i32
    %c0_i32_2 = arith.constant 0 : i32
    %3 = arith.cmpi ne, %2, %c0_i32_2 : i32
    scf.if %3 {
      %11 = vector.extract_strided_slice %0 {offsets = [0, 0, 0], sizes = [2, 1, 32], strides = [1, 1, 1]} : vector<2x8x32xf32> to vector<2x1x32xf32>
      %12 = vector.shape_cast %11 : vector<2x1x32xf32> to vector<2x32xf32>
      %cst_9 = arith.constant 0.000000e+00 : f32
      %13 = vector.broadcast %cst_9 : f32 to vector<2x32xf32>
      %14 = arith.subf %13, %12 : vector<2x32xf32>
      %c0_10 = arith.constant 0 : index
      %c0_11 = arith.constant 0 : index
      %15 = vector.load %arg12[%c0_10, %c0_11] : memref<2x32xf32, #tpu.memory_space<vmem>>, vector<2x32xf32>
      tpu.vector_store %arg12[%c0_10, %c0_11], %14 {strides = array<i32>} : memref<2x32xf32, #tpu.memory_space<vmem>>, vector<2x32xf32>,
    } else {
    }
    %c0_3 = arith.constant 0 : index
    %c0_4 = arith.constant 0 : index
    %4 = vector.load %arg12[%c0_3, %c0_4] : memref<2x32xf32, #tpu.memory_space<vmem>>, vector<2x32xf32>
    %cst = arith.constant dense<0.000000e+00> : vector<2x32xf32>
    %5 = vector.multi_reduction <add>, %0, %cst [1] : vector<2x8x32xf32> to vector<2x32xf32>
    %6 = arith.addf %4, %5 : vector<2x32xf32>
    %c0_5 = arith.constant 0 : index
    %c0_6 = arith.constant 0 : index
    %7 = vector.load %arg12[%c0_5, %c0_6] : memref<2x32xf32, #tpu.memory_space<vmem>>, vector<2x32xf32>
    tpu.vector_store %arg12[%c0_5, %c0_6], %6 {strides = array<i32>} : memref<2x32xf32, #tpu.memory_space<vmem>>, vector<2x32xf32>,
    %c0_i32_7 = arith.constant 0 : i32
    %8 = arith.cmpi eq, %arg1, %c0_i32_7 : i32
    %9 = arith.extui %8 : i1 to i32
    %c0_i32_8 = arith.constant 0 : i32
    %10 = arith.cmpi ne, %9, %c0_i32_8 : i32
    scf.if %10 {
      %c0_9 = arith.constant 0 : index
      %c0_10 = arith.constant 0 : index
      %11 = vector.load %arg12[%c0_9, %c0_10] : memref<2x32xf32, #tpu.memory_space<vmem>>, vector<2x32xf32>
      %cst_11 = arith.constant 0.142857149 : f32
      %12 = vector.broadcast %cst_11 : f32 to vector<2x32xf32>
      %13 = arith.mulf %11, %12 : vector<2x32xf32>
      %c0_12 = arith.constant 0 : index
      %c0_13 = arith.constant 0 : index
      %14 = vector.load %arg9[%c0_12, %c0_13] : memref<2x32xf32, #tpu.memory_space<vmem>>, vector<2x32xf32>
      tpu.vector_store %arg9[%c0_12, %c0_13], %13 {strides = array<i32>} : memref<2x32xf32, #tpu.memory_space<vmem>>, vector<2x32xf32>,
      %15 = arith.mulf %13, %13 : vector<2x32xf32>
      %cst_14 = arith.constant dense<0.000000e+00> : vector<2xf32>
      %16 = vector.multi_reduction <add>, %15, %cst_14 [1] : vector<2x32xf32> to vector<2xf32>
      %17 = vector.shape_cast %16 : vector<2xf32> to vector<2x1xf32>
      %c0_15 = arith.constant 0 : index
      %c0_16 = arith.constant 0 : index
      %18 = vector.load %arg3[%c0_15, %c0_16] : memref<32x128xf32, #tpu.memory_space<vmem>>, vector<32x128xf32>
      %cst_17 = arith.constant dense<0.000000e+00> : vector<2x128xf32>
      %19 = tpu.matmul %13, %18, %cst_17 {dimension_numbers = #tpu.dot_dimension_numbers<[1], [0], [0], [1], [0, 0, 1, 1], [], []>} : vector<2x32xf32>, vector<32x128xf32>, vector<2x128xf32> -> vector<2x128xf32>
      %c0_18 = arith.constant 0 : index
      %c0_19 = arith.constant 0 : index
      %20 = vector.load %arg4[%c0_18, %c0_19] : memref<1x128xf32, #tpu.memory_space<vmem>>, vector<1x128xf32>
      %21 = vector.broadcast %17 : vector<2x1xf32> to vector<2x128xf32>
      %22 = vector.broadcast %20 : vector<1x128xf32> to vector<2x128xf32>
      %23 = arith.addf %21, %22 : vector<2x128xf32>
      %cst_20 = arith.constant 2.000000e+00 : f32
      %24 = vector.broadcast %cst_20 : f32 to vector<2x128xf32>
      %25 = arith.mulf %24, %19 : vector<2x128xf32>
      %26 = arith.subf %23, %25 : vector<2x128xf32>
      %cst_21 = arith.constant 0.000000e+00 : f32
      %27 = vector.broadcast %cst_21 : f32 to vector<2x128xf32>
      %28 = arith.maximumf %26, %27 : vector<2x128xf32>
      %cst_22 = arith.constant 1.000000e+00 : f32
      %29 = vector.broadcast %cst_22 : f32 to vector<2x128xf32>
      %30 = arith.mulf %28, %29 : vector<2x128xf32>
      %cst_23 = arith.constant 1.000000e+00 : f32
      %31 = vector.broadcast %cst_23 : f32 to vector<2x128xf32>
      %32 = arith.addf %31, %30 : vector<2x128xf32>
      %33 = tpu.reciprocal %32 {approx = true} : vector<2x128xf32> -> vector<2x128xf32>
      %34 = tpu.iota {dimensions = array<i32: 1>} : vector<2x128xi32>
      %c4_i32 = arith.constant 4 : i32
      %35 = vector.broadcast %c4_i32 : i32 to vector<2x128xi32>
      %36 = arith.cmpi slt, %34, %35 : vector<2x128xi32>
      %cst_24 = arith.constant 0.000000e+00 : f32
      %37 = vector.broadcast %cst_24 : f32 to vector<2x128xf32>
      %38 = arith.select %36, %33, %37 : vector<2x128xi1>, vector<2x128xf32>
      %cst_25 = arith.constant dense<0.000000e+00> : vector<2xf32>
      %39 = vector.multi_reduction <add>, %38, %cst_25 [1] : vector<2x128xf32> to vector<2xf32>
      %40 = vector.shape_cast %39 : vector<2xf32> to vector<2x1xf32>
      %41 = tpu.reciprocal %40 {approx = true} : vector<2x1xf32> -> vector<2x1xf32>
      %42 = vector.broadcast %41 : vector<2x1xf32> to vector<2x128xf32>
      %43 = arith.mulf %38, %42 : vector<2x128xf32>
      %c0_26 = arith.constant 0 : index
      %c0_27 = arith.constant 0 : index
      %44 = vector.load %arg10[%c0_26, %c0_27] : memref<2x128xf32, #tpu.memory_space<vmem>>, vector<2x128xf32>
      tpu.vector_store %arg10[%c0_26, %c0_27], %43 {strides = array<i32>} : memref<2x128xf32, #tpu.memory_space<vmem>>, vector<2x128xf32>,
      %c0_28 = arith.constant 0 : index
      %c0_29 = arith.constant 0 : index
      %45 = vector.load %arg5[%c0_28, %c0_29] : memref<32x32xf32, #tpu.memory_space<vmem>>, vector<32x32xf32>
      %cst_30 = arith.constant dense<0.000000e+00> : vector<2x32xf32>
      %46 = tpu.matmul %13, %45, %cst_30 {dimension_numbers = #tpu.dot_dimension_numbers<[1], [0], [0], [1], [0, 0, 1, 1], [], []>} : vector<2x32xf32>, vector<32x32xf32>, vector<2x32xf32> -> vector<2x32xf32>
      %c0_31 = arith.constant 0 : index
      %c0_32 = arith.constant 0 : index
      %47 = vector.load %arg6[%c0_31, %c0_32] : memref<1x32xf32, #tpu.memory_space<vmem>>, vector<1x32xf32>
      %48 = vector.broadcast %47 : vector<1x32xf32> to vector<2x32xf32>
      %49 = arith.addf %46, %48 : vector<2x32xf32>
      %cst_33 = arith.constant 0.000000e+00 : f32
      %50 = vector.broadcast %cst_33 : f32 to vector<2x32xf32>
      %51 = arith.maximumf %49, %50 : vector<2x32xf32>
      %c0_34 = arith.constant 0 : index
      %c0_35 = arith.constant 0 : index
      %52 = vector.load %arg7[%c0_34, %c0_35] : memref<32x256xf32, #tpu.memory_space<vmem>>, vector<32x256xf32>
      %cst_36 = arith.constant dense<0.000000e+00> : vector<2x256xf32>
      %53 = tpu.matmul %51, %52, %cst_36 {dimension_numbers = #tpu.dot_dimension_numbers<[1], [0], [0], [1], [0, 0, 1, 1], [], []>} : vector<2x32xf32>, vector<32x256xf32>, vector<2x256xf32> -> vector<2x256xf32>
      %c0_37 = arith.constant 0 : index
      %c0_38 = arith.constant 0 : index
      %54 = vector.load %arg8[%c0_37, %c0_38] : memref<1x256xf32, #tpu.memory_space<vmem>>, vector<1x256xf32>
      %55 = vector.broadcast %54 : vector<1x256xf32> to vector<2x256xf32>
      %56 = arith.addf %53, %55 : vector<2x256xf32>
      %c0_39 = arith.constant 0 : index
      %c0_40 = arith.constant 0 : index
      %57 = vector.load %arg11[%c0_39, %c0_40] : memref<2x256xf32, #tpu.memory_space<vmem>>, vector<2x256xf32>
      tpu.vector_store %arg11[%c0_39, %c0_40], %56 {strides = array<i32>} : memref<2x256xf32, #tpu.memory_space<vmem>>, vector<2x256xf32>,
    } else {
    }
    return
  }
  func.func @transform_0(%arg0: i32, %arg1: i32) -> (i32, i32, i32) {
    %c0_i32 = arith.constant 0 : i32
    %c0_i32_0 = arith.constant 0 : i32
    return %arg0, %arg1, %c0_i32 : i32, i32, i32
  }
  func.func @transform_1(%arg0: i32, %arg1: i32) -> (i32, i32) {
    %c0_i32 = arith.constant 0 : i32
    %c0_i32_0 = arith.constant 0 : i32
    %c0_i32_1 = arith.constant 0 : i32
    return %c0_i32, %c0_i32_0 : i32, i32
  }
  func.func @transform_2(%arg0: i32, %arg1: i32) -> (i32, i32) {
    %c0_i32 = arith.constant 0 : i32
    %c0_i32_0 = arith.constant 0 : i32
    %c0_i32_1 = arith.constant 0 : i32
    return %c0_i32, %c0_i32_0 : i32, i32
  }
  func.func @transform_3(%arg0: i32, %arg1: i32) -> (i32, i32) {
    %c0_i32 = arith.constant 0 : i32
    %c0_i32_0 = arith.constant 0 : i32
    %c0_i32_1 = arith.constant 0 : i32
    return %c0_i32, %c0_i32_0 : i32, i32
  }
  func.func @transform_4(%arg0: i32, %arg1: i32) -> (i32, i32) {
    %c0_i32 = arith.constant 0 : i32
    %c0_i32_0 = arith.constant 0 : i32
    %c0_i32_1 = arith.constant 0 : i32
    return %c0_i32, %c0_i32_0 : i32, i32
  }
  func.func @transform_5(%arg0: i32, %arg1: i32) -> (i32, i32) {
    %c0_i32 = arith.constant 0 : i32
    %c0_i32_0 = arith.constant 0 : i32
    %c0_i32_1 = arith.constant 0 : i32
    return %c0_i32, %c0_i32_0 : i32, i32
  }
  func.func @transform_6(%arg0: i32, %arg1: i32) -> (i32, i32) {
    %c0_i32 = arith.constant 0 : i32
    %c0_i32_0 = arith.constant 0 : i32
    %c0_i32_1 = arith.constant 0 : i32
    return %c0_i32, %c0_i32_0 : i32, i32
  }
  func.func @transform_7(%arg0: i32, %arg1: i32) -> (i32, i32) {
    %c0_i32 = arith.constant 0 : i32
    %c0_i32_0 = arith.constant 0 : i32
    return %arg0, %c0_i32 : i32, i32
  }
  func.func @transform_8(%arg0: i32, %arg1: i32) -> (i32, i32) {
    %c0_i32 = arith.constant 0 : i32
    %c0_i32_0 = arith.constant 0 : i32
    return %arg0, %c0_i32 : i32, i32
  }
  func.func @transform_9(%arg0: i32, %arg1: i32) -> (i32, i32) {
    %c0_i32 = arith.constant 0 : i32
    %c0_i32_0 = arith.constant 0 : i32
    return %arg0, %c0_i32 : i32, i32
  }
}

</mosaic_0001>

<llo_original>
// kernel: tpu_custom_call.1
$region0: #{tpu_custom_call.1}
  #allocation0 [shape = 'u32[]', space=smem, size = 0x4, offset = 0x4, fixed_abs, tag = 'smem constant byte address 0x4 - core index']
  #allocation1 [shape = 'u32[144,128]{1,0:T(1,128)}', space=vmem, size = 0x12000, scoped, tag = 'internal scratch']
  #allocation2 [shape = 'f32[2,32]{1,0:T(2,128)}', space=vmem, size = 0x400, scoped, tag = 'scratch operand']
  %s0 = inlined_call_operand.hbm [shape: f32[2,8,32], index: 0, kind: input, shape index: {}]
  %s1 = inlined_call_operand.hbm [shape: f32[32,128], index: 1, kind: input, shape index: {}]
  %s2 = inlined_call_operand.vmem [shape: f32[1,128], index: 2, kind: input, shape index: {}]
  %s3 = inlined_call_operand.hbm [shape: f32[32,32], index: 3, kind: input, shape index: {}]
  %s4 = inlined_call_operand.vmem [shape: f32[1,32], index: 4, kind: input, shape index: {}]
  %s5 = inlined_call_operand.hbm [shape: f32[32,256], index: 5, kind: input, shape index: {}]
  %s6 = inlined_call_operand.vmem [shape: f32[1,256], index: 6, kind: input, shape index: {}]
  %s7 = inlined_call_operand.hbm [shape: f32[2,32], index: 7, kind: output, shape index: {0}]
  %s8 = inlined_call_operand.hbm [shape: f32[2,128], index: 8, kind: output, shape index: {1}]
  %s9 = inlined_call_operand.hbm [shape: f32[2,256], index: 9, kind: output, shape index: {2}]
  %10 = xla_tuple %s7, %s8, %s9
  %s11 = sld [smem:[#allocation0]]
  $region78: #{tpu_custom_call.1} parent=0
    _
  %s13 = ssub.s32 1, %s11
  %s14 = scalar_select 0, %s13, %s11
  $region1: #{tpu_custom_call.1} parent=0
    #allocation3 [shape = 'u8[8192]{0}', space=vmem, size = 0x2000, scoped, tag = 'input window, operand 0, single buffered']
    #allocation4 [shape = 's32[1]{0}', space=sflag, size = 0x4, scoped, tag = 'scoped memory for tpu_custom_call.1']
    #allocation5 [shape = 's32[1]{0}', space=sflag, size = 0x4, scoped, tag = 'scoped memory for tpu_custom_call.1']
    #allocation6 [shape = 'u8[16384]{0}', space=vmem, size = 0x4000, scoped, tag = 'input window, operand 1, single buffered']
    #allocation7 [shape = 's32[1]{0}', space=sflag, size = 0x4, scoped, tag = 'scoped memory for tpu_custom_call.1']
    #allocation8 [shape = 'u8[16384]{0}', space=vmem, size = 0x4000, scoped, tag = 'input window, operand 3, single buffered']
    #allocation9 [shape = 'u8[32768]{0}', space=vmem, size = 0x8000, scoped, tag = 'input window, operand 5, single buffered']
    #allocation10 [shape = 's32[1]{0}', space=sflag, size = 0x4, scoped, tag = 'scoped memory for tpu_custom_call.1']
    #allocation11 [shape = 'u8[1024]{0}', space=vmem, size = 0x400, scoped, tag = 'output window, operand 0, single buffered']
    #allocation12 [shape = 'u8[1024]{0}', space=vmem, size = 0x400, scoped, tag = 'output window, operand 1, single buffered']
    #allocation13 [shape = 's32[1]{0}', space=sflag, size = 0x4, scoped, tag = 'scoped memory for tpu_custom_call.1']
    #allocation14 [shape = 'u8[2048]{0}', space=vmem, size = 0x800, scoped, tag = 'output window, operand 2, single buffered']
    %15 = vsyncpa [#allocation4], 0
    %16 = vsyncpa [#allocation7], 0
    %17 = vsyncpa [#allocation10], 0
    %18 = vsyncpa [#allocation5], 0
    %19 = vsyncpa [#allocation13], 0
    // Predicated region
    $region2: #{tpu_custom_call.1} parent=1 // pred_check
      _
    $region3: #{tpu_custom_call.1} parent=1 // pred_check_branch
      %21 = sbr.rel (0) target = $region5
    $region4: #{tpu_custom_call.1} parent=1 // pred_region
      %s23 = ssub.s32 256, 256
      %24 = vsyncadd [#allocation4], %s23
      %s25 = sshll.u32 [#allocation3], 4
      %s26 = int_to_ptr.vmem [resolvable:$true] %s25
      %31 = dma.hbm_to_vmem [thread:$0]  %s0, 256, %s26, [#allocation4], 128, 128, 8
    $region5: #{tpu_custom_call.1} parent=1 // pred_fallthru
      _
    // Predicated region
    $region6: #{tpu_custom_call.1} parent=1 // pred_check
      _
    $region7: #{tpu_custom_call.1} parent=1 // pred_check_branch
      %33 = sbr.rel (0) target = $region9
    $region8: #{tpu_custom_call.1} parent=1 // pred_region
      %s35 = ssub.s32 512, 512
      %36 = vsyncadd [#allocation7], %s35
      %s37 = sshll.u32 [#allocation6], 4
      %s38 = int_to_ptr.vmem [resolvable:$true] %s37
      %43 = dma.hbm_to_vmem [thread:$0]  %s1, 512, %s38, [#allocation7], 128, 128, 8
    $region9: #{tpu_custom_call.1} parent=1 // pred_fallthru
      _
    // Predicated region
    $region10: #{tpu_custom_call.1} parent=1 // pred_check
      _
    $region11: #{tpu_custom_call.1} parent=1 // pred_check_branch
      %45 = sbr.rel (0) target = $region13
    $region12: #{tpu_custom_call.1} parent=1 // pred_region
      _
    $region13: #{tpu_custom_call.1} parent=1 // pred_fallthru
      _
    // Predicated region
    $region14: #{tpu_custom_call.1} parent=1 // pred_check
      _
    $region15: #{tpu_custom_call.1} parent=1 // pred_check_branch
      %47 = sbr.rel (0) target = $region17
    $region16: #{tpu_custom_call.1} parent=1 // pred_region
      %s49 = ssub.s32 512, 512
      %50 = vsyncadd [#allocation7], %s49
      %s51 = sshll.u32 [#allocation8], 4
      %s52 = int_to_ptr.vmem [resolvable:$true] %s51
      %57 = dma.hbm_to_vmem [thread:$0]  %s3, 512, %s52, [#allocation7], 128, 128, 8
    $region17: #{tpu_custom_call.1} parent=1 // pred_fallthru
      _
    // Predicated region
    $region18: #{tpu_custom_call.1} parent=1 // pred_check
      _
    $region19: #{tpu_custom_call.1} parent=1 // pred_check_branch
      %59 = sbr.rel (0) target = $region21
    $region20: #{tpu_custom_call.1} parent=1 // pred_region
      _
    $region21: #{tpu_custom_call.1} parent=1 // pred_fallthru
      _
    // Predicated region
    $region22: #{tpu_custom_call.1} parent=1 // pred_check
      _
    $region23: #{tpu_custom_call.1} parent=1 // pred_check_branch
      %61 = sbr.rel (0) target = $region25
    $region24: #{tpu_custom_call.1} parent=1 // pred_region
      %s63 = ssub.s32 1024, 1024
      %64 = vsyncadd [#allocation10], %s63
      %s65 = sshll.u32 [#allocation9], 4
      %s66 = int_to_ptr.vmem [resolvable:$true] %s65
      %71 = dma.hbm_to_vmem [thread:$0]  %s5, 1024, %s66, [#allocation10], 256, 256, 16
    $region25: #{tpu_custom_call.1} parent=1 // pred_fallthru
      _
    // Predicated region
    $region26: #{tpu_custom_call.1} parent=1 // pred_check
      _
    $region27: #{tpu_custom_call.1} parent=1 // pred_check_branch
      %73 = sbr.rel (0) target = $region29
    $region28: #{tpu_custom_call.1} parent=1 // pred_region
      _
    $region29: #{tpu_custom_call.1} parent=1 // pred_fallthru
      _
    // Predicated region
    $region30: #{tpu_custom_call.1} parent=1 // pred_check
      _
    $region31: #{tpu_custom_call.1} parent=1 // pred_check_branch
      %75 = sbr.rel (0) target = $region33
    $region32: #{tpu_custom_call.1} parent=1 // pred_region
      %76 = dma.done [#allocation4], 256
    $region33: #{tpu_custom_call.1} parent=1 // pred_fallthru
      _
    // Predicated region
    $region34: #{tpu_custom_call.1} parent=1 // pred_check
      _
    $region35: #{tpu_custom_call.1} parent=1 // pred_check_branch
      %78 = sbr.rel (0) target = $region37
    $region36: #{tpu_custom_call.1} parent=1 // pred_region
      %79 = dma.done [#allocation7], 512
    $region37: #{tpu_custom_call.1} parent=1 // pred_fallthru
      _
    // Predicated region
    $region38: #{tpu_custom_call.1} parent=1 // pred_check
      _
    $region39: #{tpu_custom_call.1} parent=1 // pred_check_branch
      %81 = sbr.rel (0) target = $region41
    $region40: #{tpu_custom_call.1} parent=1 // pred_region
      %82 = dma.done [#allocation7], 512
    $region41: #{tpu_custom_call.1} parent=1 // pred_fallthru
      _
    // Predicated region
    $region42: #{tpu_custom_call.1} parent=1 // pred_check
      _
    $region43: #{tpu_custom_call.1} parent=1 // pred_check_branch
      %84 = sbr.rel (0) target = $region45
    $region44: #{tpu_custom_call.1} parent=1 // pred_region
      %85 = dma.done [#allocation10], 1024
    $region45: #{tpu_custom_call.1} parent=1 // pred_fallthru
      _
    %v86 = vld [vmem:[#allocation3] sm:$0xff]
    %v87 = vld [vmem:[#allocation3 + $0x8] sm:$0xff]
    %p88 = scmp.eq.s32.totalorder 0, 0
    // Predicated region
    $region46: #{tpu_custom_call.1} parent=1 // pred_check
      %p89 = pneg %p88
    $region47: #{tpu_custom_call.1} parent=1 // pred_check_branch
      %91 = sbr.rel (%p89) target = $region49
    $region48: #{tpu_custom_call.1} parent=1 // pred_region
      %v92 = vsub.f32 0.0, %v86
      %v93 = vsub.f32 0.0, %v87
      %v96 = vrot.slane %v93, 7
      %vm97 = vcmask 1041409
      %v98 = vsel %vm97, %v96, %v92
      %vm100 = vcmask 254976
      %101 = vst.msk [vmem:[#allocation2] sm:$0x3] %vm100, %v98
    $region49: #{tpu_custom_call.1} parent=1 // pred_fallthru
      _
    %v102 = vld [vmem:[#allocation2] sm:$0x3]
    %vm103 = vcmask 261120
    %v104 = vsel %vm103, %v86, 0.0
    %v105 = vrot.slane %v104, 4
    %v106 = vadd.f32 %v104, %v105
    %v107 = vrot.slane %v106, 2
    %v108 = vadd.f32 %v106, %v107
    %v109 = vrot.slane %v108, 1
    %v110 = vadd.f32 %v108, %v109
    %v111 = vsel %vm103, %v87, 0.0
    %v112 = vrot.slane %v111, 4
    %v113 = vadd.f32 %v111, %v112
    %v114 = vrot.slane %v113, 2
    %v115 = vadd.f32 %v113, %v114
    %v116 = vrot.slane %v115, 1
    %v117 = vadd.f32 %v115, %v116
    %vm120 = vcmask 1041409
    %v121 = vsel %vm120, %v117, %v110
    %v123 = vadd.f32 %v102, %v121
    %vm124 = vcmask 254976
    %125 = vst.msk [vmem:[#allocation2] sm:$0x3] %vm124, %v123
    // Predicated region
    $region50: #{tpu_custom_call.1} parent=1 // pred_check
      %p126 = pneg %p88
    $region51: #{tpu_custom_call.1} parent=1 // pred_check_branch
      %128 = sbr.rel (%p126) target = $region53
    $region52: #{tpu_custom_call.1} parent=1 // pred_region
      %v129 = vld [vmem:[#allocation2] sm:$0x3]
      %v130 = vmul.f32 %v129, 0.14285715
      %131 = vst.msk [vmem:[#allocation11] sm:$0x3] %vm124, %v130
      %v132 = vmul.f32 %v130, %v130
      %v133 = vsel %vm124, %v132, 0.0
      %134 = vadd.xlane.f32.xlu0 %v133
      %v135 = vpop.xlane.xlu0 %134
      %v136 = vld [vmem:[#allocation6] sm:$0xff]
      %v137 = vld [vmem:[#allocation6 + $0x8] sm:$0xff]
      %v138 = vld [vmem:[#allocation6 + $0x10] sm:$0xff]
      %v139 = vld [vmem:[#allocation6 + $0x18] sm:$0xff]
      %v141 = vsel %vm103, %v130, 0
      %143 = vmatprep.subr.mxu0 0.0
      %144 = vmatpush1.msra.mxu0 %v136
      %145 = vmatprep.subr.mxu0 0.0
      %146 = vmatpush1.msra.mxu0 %v137
      %147 = vmatprep.subr.mxu0 0.0
      %148 = vmatpush1.msra.mxu0 %v138
      %149 = vmatprep.subr.mxu0 0.0
      %150 = vmatpush1.msra.mxu0 %v139
      %151 = vmatprep.subr.mxu0 0.0
      %152 = vmatpush1.msra.mxu0 0.0
      %153 = vmatprep.subr.mxu0 0.0
      %154 = vmatpush1.msra.mxu0 0.0
      %155 = vmatprep.subr.mxu0 0.0
      %156 = vmatpush1.msra.mxu0 0.0
      %157 = vmatprep.subr.mxu0 0.0
      %158 = vmatpush1.msra.mxu0 0.0
      %159 = vmatprep.subr.mxu0 0.0
      %160 = vmatpush1.msra.mxu0 0.0
      %161 = vmatprep.subr.mxu0 0.0
      %162 = vmatpush1.msra.mxu0 0.0
      %163 = vmatprep.subr.mxu0 0.0
      %164 = vmatpush1.msra.mxu0 0.0
      %165 = vmatprep.subr.mxu0 0.0
      %166 = vmatpush1.msra.mxu0 0.0
      %167 = vmatprep.subr.mxu0 0.0
      %168 = vmatpush1.msra.mxu0 0.0
      %169 = vmatprep.subr.mxu0 0.0
      %170 = vmatpush1.msra.mxu0 0.0
      %171 = vmatprep.subr.mxu0 0.0
      %172 = vmatpush1.msra.mxu0 0.0
      %173 = vmatprep.subr.mxu0 0.0
      %174 = vmatpush1.msra.mxu0 0.0
      %175 = vmatprep.subr.mxu0 0.0
      %176 = vmatpush1.msra.mxu0 0.0
      %177 = vmatprep.subr.mxu0 0.0
      %178 = vmatpush1.msra.mxu0 0.0
      %179 = vmatprep.subr.mxu0 0.0
      %180 = vmatpush1.msra.mxu0 0.0
      %181 = vmatprep.subr.mxu0 0.0
      %182 = vmatpush1.msra.mxu0 0.0
      %183 = vmatprep.subr.mxu0 0.0
      %184 = vmatpush1.msra.mxu0 0.0
      %185 = vmatprep.subr.mxu0 0.0
      %186 = vmatpush1.msra.mxu0 0.0
      %187 = vmatprep.subr.mxu0 0.0
      %188 = vmatpush1.msra.mxu0 0.0
      %189 = vmatprep.subr.mxu0 0.0
      %190 = vmatpush1.msra.mxu0 0.0
      %191 = vmatprep.subr.mxu0 0.0
      %192 = vmatpush1.msra.mxu0 0.0
      %193 = vmatprep.subr.mxu0 0.0
      %194 = vmatpush1.msra.mxu0 0.0
      %195 = vmatprep.subr.mxu0 0.0
      %196 = vmatpush1.msra.mxu0 0.0
      %197 = vmatprep.subr.mxu0 0.0
      %198 = vmatpush1.msra.mxu0 0.0
      %199 = vmatprep.subr.mxu0 0.0
      %200 = vmatpush1.msra.mxu0 0.0
      %201 = vmatprep.subr.mxu0 0.0
      %202 = vmatpush1.msra.mxu0 0.0
      %203 = vmatprep.subr.mxu0 0.0
      %204 = vmatpush1.msra.mxu0 0.0
      %205 = vmatprep.subr.mxu0 0.0
      %206 = vmatpush1.msra.mxu0 0.0
      %207 = vmatprep.mubr.f32.mxu0 0.0
      %208 = vmatmul.mubr.f32.gmra.mrb[0].mxu0 %v141
      %v209 = vpop.f32.mrb[0].mxu0
      %v210 = vadd.f32 0.0, %v209
      %v211 = vpop.f32.mrb[0].mxu0
      %212 = vdwg.mxu0
      %v213 = vld [vmem:[%s2] sm:$0x1]
      %v215 = vlaneseq
      %v216 = vshrl.u32 %v215, 7
      %v217 = vsub.s32 0, %v216
      %v218 = vrot.slane %v213, %v217
      %v220 = vadd.f32 %v135, %v218
      %v221 = vmul.f32 %v210, 2.0
      %v222 = vsub.f32 %v220, %v221
      %v223 = vmax.f32 %v222, 0.0
      %v224 = vadd.f32 %v223, 1.0
      %v225 = vrcp.pop %v224
      %v226 = vlaneseq
      %v227 = vand.u32 %v226, 127
      %vm228 = vcmp.lt.s32.totalorder %v227, 4
      %v229 = vsel %vm228, %v225, 0.0
      %vm230 = vcmask 1041408
      %v231 = vsel %vm230, %v229, 0.0
      %232 = vadd.xlane.f32.xlu0 %v231
      %v233 = vpop.xlane.xlu0 %232
      %v234 = vrcp.pop %v233
      %v235 = vmul.f32 %v229, %v234
      %236 = vst [vmem:[#allocation12] sm:$0x3] %v235
      %v237 = vld [vmem:[#allocation8] sm:$0xff]
      %v238 = vld [vmem:[#allocation8 + $0x8] sm:$0xff]
      %v239 = vld [vmem:[#allocation8 + $0x10] sm:$0xff]
      %v240 = vld [vmem:[#allocation8 + $0x18] sm:$0xff]
      %v241 = vld [vmem:[%s4] sm:$0x1]
      %v243 = vlaneseq
      %v244 = vshrl.u32 %v243, 7
      %v245 = vsub.s32 0, %v244
      %v246 = vrot.slane %v241, %v245
      %248 = vmatprep.subr.mxu0 0.0
      %249 = vmatpush1.msra.mxu0 %v237
      %250 = vmatprep.subr.mxu0 0.0
      %251 = vmatpush1.msra.mxu0 %v238
      %252 = vmatprep.subr.mxu0 0.0
      %253 = vmatpush1.msra.mxu0 %v239
      %254 = vmatprep.subr.mxu0 0.0
      %255 = vmatpush1.msra.mxu0 %v240
      %256 = vmatprep.subr.mxu0 0.0
      %257 = vmatpush1.msra.mxu0 0.0
      %258 = vmatprep.subr.mxu0 0.0
      %259 = vmatpush1.msra.mxu0 0.0
      %260 = vmatprep.subr.mxu0 0.0
      %261 = vmatpush1.msra.mxu0 0.0
      %262 = vmatprep.subr.mxu0 0.0
      %263 = vmatpush1.msra.mxu0 0.0
      %264 = vmatprep.subr.mxu0 0.0
      %265 = vmatpush1.msra.mxu0 0.0
      %266 = vmatprep.subr.mxu0 0.0
      %267 = vmatpush1.msra.mxu0 0.0
      %268 = vmatprep.subr.mxu0 0.0
      %269 = vmatpush1.msra.mxu0 0.0
      %270 = vmatprep.subr.mxu0 0.0
      %271 = vmatpush1.msra.mxu0 0.0
      %272 = vmatprep.subr.mxu0 0.0
      %273 = vmatpush1.msra.mxu0 0.0
      %274 = vmatprep.subr.mxu0 0.0
      %275 = vmatpush1.msra.mxu0 0.0
      %276 = vmatprep.subr.mxu0 0.0
      %277 = vmatpush1.msra.mxu0 0.0
      %278 = vmatprep.subr.mxu0 0.0
      %279 = vmatpush1.msra.mxu0 0.0
      %280 = vmatprep.subr.mxu0 0.0
      %281 = vmatpush1.msra.mxu0 0.0
      %282 = vmatprep.subr.mxu0 0.0
      %283 = vmatpush1.msra.mxu0 0.0
      %284 = vmatprep.subr.mxu0 0.0
      %285 = vmatpush1.msra.mxu0 0.0
      %286 = vmatprep.subr.mxu0 0.0
      %287 = vmatpush1.msra.mxu0 0.0
      %288 = vmatprep.subr.mxu0 0.0
      %289 = vmatpush1.msra.mxu0 0.0
      %290 = vmatprep.subr.mxu0 0.0
      %291 = vmatpush1.msra.mxu0 0.0
      %292 = vmatprep.subr.mxu0 0.0
      %293 = vmatpush1.msra.mxu0 0.0
      %294 = vmatprep.subr.mxu0 0.0
      %295 = vmatpush1.msra.mxu0 0.0
      %296 = vmatprep.subr.mxu0 0.0
      %297 = vmatpush1.msra.mxu0 0.0
      %298 = vmatprep.subr.mxu0 0.0
      %299 = vmatpush1.msra.mxu0 0.0
      %300 = vmatprep.subr.mxu0 0.0
      %301 = vmatpush1.msra.mxu0 0.0
      %302 = vmatprep.subr.mxu0 0.0
      %303 = vmatpush1.msra.mxu0 0.0
      %304 = vmatprep.subr.mxu0 0.0
      %305 = vmatpush1.msra.mxu0 0.0
      %306 = vmatprep.subr.mxu0 0.0
      %307 = vmatpush1.msra.mxu0 0.0
      %308 = vmatprep.subr.mxu0 0.0
      %309 = vmatpush1.msra.mxu0 0.0
      %310 = vmatprep.subr.mxu0 0.0
      %311 = vmatpush1.msra.mxu0 0.0
      %312 = vmatprep.mubr.f32.mxu0 0.0
      %313 = vmatmul.mubr.f32.gmra.mrb[0].mxu0 %v141
      %v314 = vpop.f32.mrb[0].mxu0
      %v315 = vadd.f32 %v246, %v314
      %v316 = vpop.f32.mrb[0].mxu0
      %317 = vdwg.mxu0
      %v318 = vmax.f32 %v315, 0.0
      %v319 = vld [vmem:[#allocation9] sm:$0xff]
      %v320 = vld [vmem:[#allocation9 + $0x8] sm:$0xff]
      %v321 = vld [vmem:[#allocation9 + $0x10] sm:$0xff]
      %v322 = vld [vmem:[#allocation9 + $0x18] sm:$0xff]
      %v323 = vld [vmem:[#allocation9 + $0x20] sm:$0xff]
      %v324 = vld [vmem:[#allocation9 + $0x28] sm:$0xff]
      %v325 = vld [vmem:[#allocation9 + $0x30] sm:$0xff]
      %v326 = vld [vmem:[#allocation9 + $0x38] sm:$0xff]
      %v327 = vld [vmem:[%s6] sm:$0x3]
      %v329 = vlaneseq
      %v330 = vshrl.u32 %v329, 7
      %v331 = vsub.s32 0, %v330
      %v332 = vrot.slane %v327, %v331
      %v333 = vlaneseq
      %v334 = vshrl.u32 %v333, 7
      %v335 = vsub.s32 1, %v334
      %v336 = vrot.slane %v327, %v335
      %v340 = vsel %vm103, %v318, 0
      %342 = vmatprep.subr.mxu0 %v320
      %343 = vmatpush1.msra.mxu0 %v319
      %344 = vmatprep.subr.mxu0 %v322
      %345 = vmatpush1.msra.mxu0 %v321
      %346 = vmatprep.subr.mxu0 %v324
      %347 = vmatpush1.msra.mxu0 %v323
      %348 = vmatprep.subr.mxu0 %v326
      %349 = vmatpush1.msra.mxu0 %v325
      %350 = vmatprep.subr.mxu0 0.0
      %351 = vmatpush1.msra.mxu0 0.0
      %352 = vmatprep.subr.mxu0 0.0
      %353 = vmatpush1.msra.mxu0 0.0
      %354 = vmatprep.subr.mxu0 0.0
      %355 = vmatpush1.msra.mxu0 0.0
      %356 = vmatprep.subr.mxu0 0.0
      %357 = vmatpush1.msra.mxu0 0.0
      %358 = vmatprep.subr.mxu0 0.0
      %359 = vmatpush1.msra.mxu0 0.0
      %360 = vmatprep.subr.mxu0 0.0
      %361 = vmatpush1.msra.mxu0 0.0
      %362 = vmatprep.subr.mxu0 0.0
      %363 = vmatpush1.msra.mxu0 0.0
      %364 = vmatprep.subr.mxu0 0.0
      %365 = vmatpush1.msra.mxu0 0.0
      %366 = vmatprep.subr.mxu0 0.0
      %367 = vmatpush1.msra.mxu0 0.0
      %368 = vmatprep.subr.mxu0 0.0
      %369 = vmatpush1.msra.mxu0 0.0
      %370 = vmatprep.subr.mxu0 0.0
      %371 = vmatpush1.msra.mxu0 0.0
      %372 = vmatprep.subr.mxu0 0.0
      %373 = vmatpush1.msra.mxu0 0.0
      %374 = vmatprep.subr.mxu0 0.0
      %375 = vmatpush1.msra.mxu0 0.0
      %376 = vmatprep.subr.mxu0 0.0
      %377 = vmatpush1.msra.mxu0 0.0
      %378 = vmatprep.subr.mxu0 0.0
      %379 = vmatpush1.msra.mxu0 0.0
      %380 = vmatprep.subr.mxu0 0.0
      %381 = vmatpush1.msra.mxu0 0.0
      %382 = vmatprep.subr.mxu0 0.0
      %383 = vmatpush1.msra.mxu0 0.0
      %384 = vmatprep.subr.mxu0 0.0
      %385 = vmatpush1.msra.mxu0 0.0
      %386 = vmatprep.subr.mxu0 0.0
      %387 = vmatpush1.msra.mxu0 0.0
      %388 = vmatprep.subr.mxu0 0.0
      %389 = vmatpush1.msra.mxu0 0.0
      %390 = vmatprep.subr.mxu0 0.0
      %391 = vmatpush1.msra.mxu0 0.0
      %392 = vmatprep.subr.mxu0 0.0
      %393 = vmatpush1.msra.mxu0 0.0
      %394 = vmatprep.subr.mxu0 0.0
      %395 = vmatpush1.msra.mxu0 0.0
      %396 = vmatprep.subr.mxu0 0.0
      %397 = vmatpush1.msra.mxu0 0.0
      %398 = vmatprep.subr.mxu0 0.0
      %399 = vmatpush1.msra.mxu0 0.0
      %400 = vmatprep.subr.mxu0 0.0
      %401 = vmatpush1.msra.mxu0 0.0
      %402 = vmatprep.subr.mxu0 0.0
      %403 = vmatpush1.msra.mxu0 0.0
      %404 = vmatprep.subr.mxu0 0.0
      %405 = vmatpush1.msra.mxu0 0.0
      %406 = vmatprep.mubr.f32.mxu0 0.0
      %407 = vmatmul.mubr.f32.gmra.mrb[0].mxu0 %v340
      %v408 = vpop.f32.mrb[0].mxu0
      %v409 = vadd.f32 %v332, %v408
      %v410 = vpop.f32.mrb[0].mxu0
      %v411 = vadd.f32 %v336, %v410
      %412 = vdwg.mxu0
      %v415 = vcombine.low %v409, %v411
      %v417 = vunpack.c.l.s4 1983009808
      %v418 = vunpack.c.0.s8 %v417
      %v419 = vlaneseq
      %v420 = vshrl.u32 %v419, 7
      %v421 = vsub.s32 %v418, %v420
      %v422 = vrot.slane %v415, %v421
      %424 = vst [vmem:[#allocation14] sm:$0xf] %v422
    $region53: #{tpu_custom_call.1} parent=1 // pred_fallthru
      _
    // Predicated region
    $region54: #{tpu_custom_call.1} parent=1 // pred_check
      _
    $region55: #{tpu_custom_call.1} parent=1 // pred_check_branch
      %426 = sbr.rel (0) target = $region57
    $region56: #{tpu_custom_call.1} parent=1 // pred_region
      %s428 = ssub.s32 32, 32
      %429 = vsyncadd [#allocation5], %s428
      %s431 = sshll.u32 [#allocation11], 4
      %s432 = int_to_ptr.vmem [resolvable:$true] %s431
      %434 = dma.vmem_to_hbm [thread:$0]  %s432, 32, %s7, [#allocation5]
    $region57: #{tpu_custom_call.1} parent=1 // pred_fallthru
      _
    // Predicated region
    $region58: #{tpu_custom_call.1} parent=1 // pred_check
      _
    $region59: #{tpu_custom_call.1} parent=1 // pred_check_branch
      %436 = sbr.rel (0) target = $region61
    $region60: #{tpu_custom_call.1} parent=1 // pred_region
      %s438 = ssub.s32 32, 32
      %439 = vsyncadd [#allocation13], %s438
      %s441 = sshll.u32 [#allocation12], 4
      %s442 = int_to_ptr.vmem [resolvable:$true] %s441
      %444 = dma.vmem_to_hbm [thread:$0]  %s442, 32, %s8, [#allocation13]
    $region61: #{tpu_custom_call.1} parent=1 // pred_fallthru
      _
    // Predicated region
    $region62: #{tpu_custom_call.1} parent=1 // pred_check
      _
    $region63: #{tpu_custom_call.1} parent=1 // pred_check_branch
      %446 = sbr.rel (0) target = $region65
    $region64: #{tpu_custom_call.1} parent=1 // pred_region
      %s448 = ssub.s32 64, 64
      %449 = vsyncadd [#allocation13], %s448
      %s451 = sshll.u32 [#allocation14], 4
      %s452 = int_to_ptr.vmem [resolvable:$true] %s451
      %454 = dma.vmem_to_hbm [thread:$0]  %s452, 64, %s9, [#allocation13]
    $region65: #{tpu_custom_call.1} parent=1 // pred_fallthru
      _
    // Predicated region
    $region66: #{tpu_custom_call.1} parent=1 // pred_check
      _
    $region67: #{tpu_custom_call.1} parent=1 // pred_check_branch
      %456 = sbr.rel (0) target = $region69
    $region68: #{tpu_custom_call.1} parent=1 // pred_region
      %457 = dma.done [#allocation5], 32
    $region69: #{tpu_custom_call.1} parent=1 // pred_fallthru
      _
    // Predicated region
    $region70: #{tpu_custom_call.1} parent=1 // pred_check
      _
    $region71: #{tpu_custom_call.1} parent=1 // pred_check_branch
      %459 = sbr.rel (0) target = $region73
    $region72: #{tpu_custom_call.1} parent=1 // pred_region
      %460 = dma.done [#allocation13], 32
    $region73: #{tpu_custom_call.1} parent=1 // pred_fallthru
      _
    // Predicated region
    $region74: #{tpu_custom_call.1} parent=1 // pred_check
      _
    $region75: #{tpu_custom_call.1} parent=1 // pred_check_branch
      %462 = sbr.rel (0) target = $region77
    $region76: #{tpu_custom_call.1} parent=1 // pred_region
      %463 = dma.done [#allocation13], 64
    $region77: #{tpu_custom_call.1} parent=1 // pred_fallthru
      _
    %464 = vsyncpa [#allocation4], 1
    %465 = vsyncpa [#allocation7], 1
    %466 = vsyncpa [#allocation10], 1
    %467 = vsyncpa [#allocation5], 1
    %468 = vsyncpa [#allocation13], 1

// kernel: tpu_custom_call.1
$region0: #{tpu_custom_call.1}
  #allocation0 [shape = 'u32[]', space=smem, size = 0x4, offset = 0x4, fixed_abs, tag = 'smem constant byte address 0x4 - core index']
  #allocation1 [shape = 'u32[144,128]{1,0:T(1,128)}', space=vmem, size = 0x12000, scoped, tag = 'internal scratch']
  #allocation2 [shape = 'f32[2,32]{1,0:T(2,128)}', space=vmem, size = 0x400, scoped, tag = 'scratch operand']
  %s0 = inlined_call_operand.hbm [shape: f32[2,8,32], index: 0, kind: input, shape index: {}]
  %s1 = inlined_call_operand.hbm [shape: f32[32,128], index: 1, kind: input, shape index: {}]
  %s2 = inlined_call_operand.vmem [shape: f32[1,128], index: 2, kind: input, shape index: {}]
  %s3 = inlined_call_operand.hbm [shape: f32[32,32], index: 3, kind: input, shape index: {}]
  %s4 = inlined_call_operand.vmem [shape: f32[1,32], index: 4, kind: input, shape index: {}]
  %s5 = inlined_call_operand.hbm [shape: f32[32,256], index: 5, kind: input, shape index: {}]
  %s6 = inlined_call_operand.vmem [shape: f32[1,256], index: 6, kind: input, shape index: {}]
  %s7 = inlined_call_operand.hbm [shape: f32[2,32], index: 7, kind: output, shape index: {0}]
  %s8 = inlined_call_operand.hbm [shape: f32[2,128], index: 8, kind: output, shape index: {1}]
  %s9 = inlined_call_operand.hbm [shape: f32[2,256], index: 9, kind: output, shape index: {2}]
  %10 = xla_tuple %s7, %s8, %s9
  %s11 = sld [smem:[#allocation0]]
  $region78: #{tpu_custom_call.1} parent=0
    _
  %s13 = ssub.s32 1, %s11
  %s14 = scalar_select 0, %s13, %s11
  $region1: #{tpu_custom_call.1} parent=0
    #allocation3 [shape = 'u8[8192]{0}', space=vmem, size = 0x2000, scoped, tag = 'input window, operand 0, single buffered']
    #allocation4 [shape = 's32[1]{0}', space=sflag, size = 0x4, scoped, tag = 'scoped memory for tpu_custom_call.1']
    #allocation5 [shape = 's32[1]{0}', space=sflag, size = 0x4, scoped, tag = 'scoped memory for tpu_custom_call.1']
    #allocation6 [shape = 'u8[16384]{0}', space=vmem, size = 0x4000, scoped, tag = 'input window, operand 1, single buffered']
    #allocation7 [shape = 's32[1]{0}', space=sflag, size = 0x4, scoped, tag = 'scoped memory for tpu_custom_call.1']
    #allocation8 [shape = 'u8[16384]{0}', space=vmem, size = 0x4000, scoped, tag = 'input window, operand 3, single buffered']
    #allocation9 [shape = 'u8[32768]{0}', space=vmem, size = 0x8000, scoped, tag = 'input window, operand 5, single buffered']
    #allocation10 [shape = 's32[1]{0}', space=sflag, size = 0x4, scoped, tag = 'scoped memory for tpu_custom_call.1']
    #allocation11 [shape = 'u8[1024]{0}', space=vmem, size = 0x400, scoped, tag = 'output window, operand 0, single buffered']
    #allocation12 [shape = 'u8[1024]{0}', space=vmem, size = 0x400, scoped, tag = 'output window, operand 1, single buffered']
    #allocation13 [shape = 's32[1]{0}', space=sflag, size = 0x4, scoped, tag = 'scoped memory for tpu_custom_call.1']
    #allocation14 [shape = 'u8[2048]{0}', space=vmem, size = 0x800, scoped, tag = 'output window, operand 2, single buffered']
    %15 = vsyncpa [#allocation4], 0
    %16 = vsyncpa [#allocation7], 0
    %17 = vsyncpa [#allocation10], 0
    %18 = vsyncpa [#allocation5], 0
    %19 = vsyncpa [#allocation13], 0
    // Predicated region
    $region2: #{tpu_custom_call.1} parent=1 // pred_check
      _
    $region3: #{tpu_custom_call.1} parent=1 // pred_check_branch
      %21 = sbr.rel (0) target = $region5
    $region4: #{tpu_custom_call.1} parent=1 // pred_region
      %s23 = ssub.s32 256, 256
      %24 = vsyncadd [#allocation4], %s23
      %s25 = sshll.u32 [#allocation3], 4
      %s26 = int_to_ptr.vmem [resolvable:$true] %s25
      %31 = dma.hbm_to_vmem [thread:$0]  %s0, 256, %s26, [#allocation4], 128, 128, 8
    $region5: #{tpu_custom_call.1} parent=1 // pred_fallthru
      _
    // Predicated region
    $region6: #{tpu_custom_call.1} parent=1 // pred_check
      _
    $region7: #{tpu_custom_call.1} parent=1 // pred_check_branch
      %33 = sbr.rel (0) target = $region9
    $region8: #{tpu_custom_call.1} parent=1 // pred_region
      %s35 = ssub.s32 512, 512
      %36 = vsyncadd [#allocation7], %s35
      %s37 = sshll.u32 [#allocation6], 4
      %s38 = int_to_ptr.vmem [resolvable:$true] %s37
      %43 = dma.hbm_to_vmem [thread:$0]  %s1, 512, %s38, [#allocation7], 128, 128, 8
    $region9: #{tpu_custom_call.1} parent=1 // pred_fallthru
      _
    // Predicated region
    $region10: #{tpu_custom_call.1} parent=1 // pred_check
      _
    $region11: #{tpu_custom_call.1} parent=1 // pred_check_branch
      %45 = sbr.rel (0) target = $region13
    $region12: #{tpu_custom_call.1} parent=1 // pred_region
      _
    $region13: #{tpu_custom_call.1} parent=1 // pred_fallthru
      _
    // Predicated region
    $region14: #{tpu_custom_call.1} parent=1 // pred_check
      _
    $region15: #{tpu_custom_call.1} parent=1 // pred_check_branch
      %47 = sbr.rel (0) target = $region17
    $region16: #{tpu_custom_call.1} parent=1 // pred_region
      %s49 = ssub.s32 512, 512
      %50 = vsyncadd [#allocation7], %s49
      %s51 = sshll.u32 [#allocation8], 4
      %s52 = int_to_ptr.vmem [resolvable:$true] %s51
      %57 = dma.hbm_to_vmem [thread:$0]  %s3, 512, %s52, [#allocation7], 128, 128, 8
    $region17: #{tpu_custom_call.1} parent=1 // pred_fallthru
      _
    // Predicated region
    $region18: #{tpu_custom_call.1} parent=1 // pred_check
      _
    $region19: #{tpu_custom_call.1} parent=1 // pred_check_branch
      %59 = sbr.rel (0) target = $region21
    $region20: #{tpu_custom_call.1} parent=1 // pred_region
      _
    $region21: #{tpu_custom_call.1} parent=1 // pred_fallthru
      _
    // Predicated region
    $region22: #{tpu_custom_call.1} parent=1 // pred_check
      _
    $region23: #{tpu_custom_call.1} parent=1 // pred_check_branch
      %61 = sbr.rel (0) target = $region25
    $region24: #{tpu_custom_call.1} parent=1 // pred_region
      %s63 = ssub.s32 1024, 1024
      %64 = vsyncadd [#allocation10], %s63
      %s65 = sshll.u32 [#allocation9], 4
      %s66 = int_to_ptr.vmem [resolvable:$true] %s65
      %71 = dma.hbm_to_vmem [thread:$0]  %s5, 1024, %s66, [#allocation10], 256, 256, 16
    $region25: #{tpu_custom_call.1} parent=1 // pred_fallthru
      _
    // Predicated region
    $region26: #{tpu_custom_call.1} parent=1 // pred_check
      _
    $region27: #{tpu_custom_call.1} parent=1 // pred_check_branch
      %73 = sbr.rel (0) target = $region29
    $region28: #{tpu_custom_call.1} parent=1 // pred_region
      _
    $region29: #{tpu_custom_call.1} parent=1 // pred_fallthru
      _
    // Predicated region
    $region30: #{tpu_custom_call.1} parent=1 // pred_check
      _
    $region31: #{tpu_custom_call.1} parent=1 // pred_check_branch
      %75 = sbr.rel (0) target = $region33
    $region32: #{tpu_custom_call.1} parent=1 // pred_region
      %76 = dma.done [#allocation4], 256
    $region33: #{tpu_custom_call.1} parent=1 // pred_fallthru
      _
    // Predicated region
    $region34: #{tpu_custom_call.1} parent=1 // pred_check
      _
    $region35: #{tpu_custom_call.1} parent=1 // pred_check_branch
      %78 = sbr.rel (0) target = $region37
    $region36: #{tpu_custom_call.1} parent=1 // pred_region
      %79 = dma.done [#allocation7], 512
    $region37: #{tpu_custom_call.1} parent=1 // pred_fallthru
      _
    // Predicated region
    $region38: #{tpu_custom_call.1} parent=1 // pred_check
      _
    $region39: #{tpu_custom_call.1} parent=1 // pred_check_branch
      %81 = sbr.rel (0) target = $region41
    $region40: #{tpu_custom_call.1} parent=1 // pred_region
      %82 = dma.done [#allocation7], 512
    $region41: #{tpu_custom_call.1} parent=1 // pred_fallthru
      _
    // Predicated region
    $region42: #{tpu_custom_call.1} parent=1 // pred_check
      _
    $region43: #{tpu_custom_call.1} parent=1 // pred_check_branch
      %84 = sbr.rel (0) target = $region45
    $region44: #{tpu_custom_call.1} parent=1 // pred_region
      %85 = dma.done [#allocation10], 1024
    $region45: #{tpu_custom_call.1} parent=1 // pred_fallthru
      _
    %v86 = vld [vmem:[#allocation3] sm:$0xff]
    %v87 = vld [vmem:[#allocation3 + $0x8] sm:$0xff]
    %p88 = scmp.eq.s32.totalorder 0, 0
    // Predicated region
    $region46: #{tpu_custom_call.1} parent=1 // pred_check
      %p89 = pneg %p88
    $region47: #{tpu_custom_call.1} parent=1 // pred_check_branch
      %91 = sbr.rel (%p89) target = $region49
    $region48: #{tpu_custom_call.1} parent=1 // pred_region
      %v92 = vsub.f32 0.0, %v86
      %v93 = vsub.f32 0.0, %v87
      %v96 = vrot.slane %v93, 7
      %vm97 = vcmask 1041409
      %v98 = vsel %vm97, %v96, %v92
      %vm100 = vcmask 254976
      %101 = vst.msk [vmem:[#allocation2] sm:$0x3] %vm100, %v98
    $region49: #{tpu_custom_call.1} parent=1 // pred_fallthru
      _
    %v102 = vld [vmem:[#allocation2] sm:$0x3]
    %vm103 = vcmask 261120
    %v104 = vsel %vm103, %v86, 0.0
    %v105 = vrot.slane %v104, 4
    %v106 = vadd.f32 %v104, %v105
    %v107 = vrot.slane %v106, 2
    %v108 = vadd.f32 %v106, %v107
    %v109 = vrot.slane %v108, 1
    %v110 = vadd.f32 %v108, %v109
    %v111 = vsel %vm103, %v87, 0.0
    %v112 = vrot.slane %v111, 4
    %v113 = vadd.f32 %v111, %v112
    %v114 = vrot.slane %v113, 2
    %v115 = vadd.f32 %v113, %v114
    %v116 = vrot.slane %v115, 1
    %v117 = vadd.f32 %v115, %v116
    %vm120 = vcmask 1041409
    %v121 = vsel %vm120, %v117, %v110
    %v123 = vadd.f32 %v102, %v121
    %vm124 = vcmask 254976
    %125 = vst.msk [vmem:[#allocation2] sm:$0x3] %vm124, %v123
    // Predicated region
    $region50: #{tpu_custom_call.1} parent=1 // pred_check
      %p126 = pneg %p88
    $region51: #{tpu_custom_call.1} parent=1 // pred_check_branch
      %128 = sbr.rel (%p126) target = $region53
    $region52: #{tpu_custom_call.1} parent=1 // pred_region
      %v129 = vld [vmem:[#allocation2] sm:$0x3]
      %v130 = vmul.f32 %v129, 0.14285715
      %131 = vst.msk [vmem:[#allocation11] sm:$0x3] %vm124, %v130
      %v132 = vmul.f32 %v130, %v130
      %v133 = vsel %vm124, %v132, 0.0
      %134 = vadd.xlane.f32.xlu0 %v133
      %v135 = vpop.xlane.xlu0 %134
      %v136 = vld [vmem:[#allocation6] sm:$0xff]
      %v137 = vld [vmem:[#allocation6 + $0x8] sm:$0xff]
      %v138 = vld [vmem:[#allocation6 + $0x10] sm:$0xff]
      %v139 = vld [vmem:[#allocation6 + $0x18] sm:$0xff]
      %v141 = vsel %vm103, %v130, 0
      %143 = vmatprep.subr.mxu0 0.0
      %144 = vmatpush1.msra.mxu0 %v136
      %145 = vmatprep.subr.mxu0 0.0
      %146 = vmatpush1.msra.mxu0 %v137
      %147 = vmatprep.subr.mxu0 0.0
      %148 = vmatpush1.msra.mxu0 %v138
      %149 = vmatprep.subr.mxu0 0.0
      %150 = vmatpush1.msra.mxu0 %v139
      %151 = vmatprep.subr.mxu0 0.0
      %152 = vmatpush1.msra.mxu0 0.0
      %153 = vmatprep.subr.mxu0 0.0
      %154 = vmatpush1.msra.mxu0 0.0
      %155 = vmatprep.subr.mxu0 0.0
      %156 = vmatpush1.msra.mxu0 0.0
      %157 = vmatprep.subr.mxu0 0.0
      %158 = vmatpush1.msra.mxu0 0.0
      %159 = vmatprep.subr.mxu0 0.0
      %160 = vmatpush1.msra.mxu0 0.0
      %161 = vmatprep.subr.mxu0 0.0
      %162 = vmatpush1.msra.mxu0 0.0
      %163 = vmatprep.subr.mxu0 0.0
      %164 = vmatpush1.msra.mxu0 0.0
      %165 = vmatprep.subr.mxu0 0.0
      %166 = vmatpush1.msra.mxu0 0.0
      %167 = vmatprep.subr.mxu0 0.0
      %168 = vmatpush1.msra.mxu0 0.0
      %169 = vmatprep.subr.mxu0 0.0
      %170 = vmatpush1.msra.mxu0 0.0
      %171 = vmatprep.subr.mxu0 0.0
      %172 = vmatpush1.msra.mxu0 0.0
      %173 = vmatprep.subr.mxu0 0.0
      %174 = vmatpush1.msra.mxu0 0.0
      %175 = vmatprep.subr.mxu0 0.0
      %176 = vmatpush1.msra.mxu0 0.0
      %177 = vmatprep.subr.mxu0 0.0
      %178 = vmatpush1.msra.mxu0 0.0
      %179 = vmatprep.subr.mxu0 0.0
      %180 = vmatpush1.msra.mxu0 0.0
      %181 = vmatprep.subr.mxu0 0.0
      %182 = vmatpush1.msra.mxu0 0.0
      %183 = vmatprep.subr.mxu0 0.0
      %184 = vmatpush1.msra.mxu0 0.0
      %185 = vmatprep.subr.mxu0 0.0
      %186 = vmatpush1.msra.mxu0 0.0
      %187 = vmatprep.subr.mxu0 0.0
      %188 = vmatpush1.msra.mxu0 0.0
      %189 = vmatprep.subr.mxu0 0.0
      %190 = vmatpush1.msra.mxu0 0.0
      %191 = vmatprep.subr.mxu0 0.0
      %192 = vmatpush1.msra.mxu0 0.0
      %193 = vmatprep.subr.mxu0 0.0
      %194 = vmatpush1.msra.mxu0 0.0
      %195 = vmatprep.subr.mxu0 0.0
      %196 = vmatpush1.msra.mxu0 0.0
      %197 = vmatprep.subr.mxu0 0.0
      %198 = vmatpush1.msra.mxu0 0.0
      %199 = vmatprep.subr.mxu0 0.0
      %200 = vmatpush1.msra.mxu0 0.0
      %201 = vmatprep.subr.mxu0 0.0
      %202 = vmatpush1.msra.mxu0 0.0
      %203 = vmatprep.subr.mxu0 0.0
      %204 = vmatpush1.msra.mxu0 0.0
      %205 = vmatprep.subr.mxu0 0.0
      %206 = vmatpush1.msra.mxu0 0.0
      %207 = vmatprep.mubr.f32.mxu0 0.0
      %208 = vmatmul.mubr.f32.gmra.mrb[0].mxu0 %v141
      %v209 = vpop.f32.mrb[0].mxu0
      %v210 = vadd.f32 0.0, %v209
      %v211 = vpop.f32.mrb[0].mxu0
      %212 = vdwg.mxu0
      %v213 = vld [vmem:[%s2] sm:$0x1]
      %v215 = vlaneseq
      %v216 = vshrl.u32 %v215, 7
      %v217 = vsub.s32 0, %v216
      %v218 = vrot.slane %v213, %v217
      %v220 = vadd.f32 %v135, %v218
      %v221 = vmul.f32 %v210, 2.0
      %v222 = vsub.f32 %v220, %v221
      %v223 = vmax.f32 %v222, 0.0
      %v224 = vadd.f32 %v223, 1.0
      %v225 = vrcp.pop %v224
      %v226 = vlaneseq
      %v227 = vand.u32 %v226, 127
      %vm228 = vcmp.lt.s32.totalorder %v227, 4
      %v229 = vsel %vm228, %v225, 0.0
      %vm230 = vcmask 1041408
      %v231 = vsel %vm230, %v229, 0.0
      %232 = vadd.xlane.f32.xlu0 %v231
      %v233 = vpop.xlane.xlu0 %232
      %v234 = vrcp.pop %v233
      %v235 = vmul.f32 %v229, %v234
      %236 = vst [vmem:[#allocation12] sm:$0x3] %v235
      %v237 = vld [vmem:[#allocation8] sm:$0xff]
      %v238 = vld [vmem:[#allocation8 + $0x8] sm:$0xff]
      %v239 = vld [vmem:[#allocation8 + $0x10] sm:$0xff]
      %v240 = vld [vmem:[#allocation8 + $0x18] sm:$0xff]
      %v241 = vld [vmem:[%s4] sm:$0x1]
      %v243 = vlaneseq
      %v244 = vshrl.u32 %v243, 7
      %v245 = vsub.s32 0, %v244
      %v246 = vrot.slane %v241, %v245
      %248 = vmatprep.subr.mxu0 0.0
      %249 = vmatpush1.msra.mxu0 %v237
      %250 = vmatprep.subr.mxu0 0.0
      %251 = vmatpush1.msra.mxu0 %v238
      %252 = vmatprep.subr.mxu0 0.0
      %253 = vmatpush1.msra.mxu0 %v239
      %254 = vmatprep.subr.mxu0 0.0
      %255 = vmatpush1.msra.mxu0 %v240
      %256 = vmatprep.subr.mxu0 0.0
      %257 = vmatpush1.msra.mxu0 0.0
      %258 = vmatprep.subr.mxu0 0.0
      %259 = vmatpush1.msra.mxu0 0.0
      %260 = vmatprep.subr.mxu0 0.0
      %261 = vmatpush1.msra.mxu0 0.0
      %262 = vmatprep.subr.mxu0 0.0
      %263 = vmatpush1.msra.mxu0 0.0
      %264 = vmatprep.subr.mxu0 0.0
      %265 = vmatpush1.msra.mxu0 0.0
      %266 = vmatprep.subr.mxu0 0.0
      %267 = vmatpush1.msra.mxu0 0.0
      %268 = vmatprep.subr.mxu0 0.0
      %269 = vmatpush1.msra.mxu0 0.0
      %270 = vmatprep.subr.mxu0 0.0
      %271 = vmatpush1.msra.mxu0 0.0
      %272 = vmatprep.subr.mxu0 0.0
      %273 = vmatpush1.msra.mxu0 0.0
      %274 = vmatprep.subr.mxu0 0.0
      %275 = vmatpush1.msra.mxu0 0.0
      %276 = vmatprep.subr.mxu0 0.0
      %277 = vmatpush1.msra.mxu0 0.0
      %278 = vmatprep.subr.mxu0 0.0
      %279 = vmatpush1.msra.mxu0 0.0
      %280 = vmatprep.subr.mxu0 0.0
      %281 = vmatpush1.msra.mxu0 0.0
      %282 = vmatprep.subr.mxu0 0.0
      %283 = vmatpush1.msra.mxu0 0.0
      %284 = vmatprep.subr.mxu0 0.0
      %285 = vmatpush1.msra.mxu0 0.0
      %286 = vmatprep.subr.mxu0 0.0
      %287 = vmatpush1.msra.mxu0 0.0
      %288 = vmatprep.subr.mxu0 0.0
      %289 = vmatpush1.msra.mxu0 0.0
      %290 = vmatprep.subr.mxu0 0.0
      %291 = vmatpush1.msra.mxu0 0.0
      %292 = vmatprep.subr.mxu0 0.0
      %293 = vmatpush1.msra.mxu0 0.0
      %294 = vmatprep.subr.mxu0 0.0
      %295 = vmatpush1.msra.mxu0 0.0
      %296 = vmatprep.subr.mxu0 0.0
      %297 = vmatpush1.msra.mxu0 0.0
      %298 = vmatprep.subr.mxu0 0.0
      %299 = vmatpush1.msra.mxu0 0.0
      %300 = vmatprep.subr.mxu0 0.0
      %301 = vmatpush1.msra.mxu0 0.0
      %302 = vmatprep.subr.mxu0 0.0
      %303 = vmatpush1.msra.mxu0 0.0
      %304 = vmatprep.subr.mxu0 0.0
      %305 = vmatpush1.msra.mxu0 0.0
      %306 = vmatprep.subr.mxu0 0.0
      %307 = vmatpush1.msra.mxu0 0.0
      %308 = vmatprep.subr.mxu0 0.0
      %309 = vmatpush1.msra.mxu0 0.0
      %310 = vmatprep.subr.mxu0 0.0
      %311 = vmatpush1.msra.mxu0 0.0
      %312 = vmatprep.mubr.f32.mxu0 0.0
      %313 = vmatmul.mubr.f32.gmra.mrb[0].mxu0 %v141
      %v314 = vpop.f32.mrb[0].mxu0
      %v315 = vadd.f32 %v246, %v314
      %v316 = vpop.f32.mrb[0].mxu0
      %317 = vdwg.mxu0
      %v318 = vmax.f32 %v315, 0.0
      %v319 = vld [vmem:[#allocation9] sm:$0xff]
      %v320 = vld [vmem:[#allocation9 + $0x8] sm:$0xff]
      %v321 = vld [vmem:[#allocation9 + $0x10] sm:$0xff]
      %v322 = vld [vmem:[#allocation9 + $0x18] sm:$0xff]
      %v323 = vld [vmem:[#allocation9 + $0x20] sm:$0xff]
      %v324 = vld [vmem:[#allocation9 + $0x28] sm:$0xff]
      %v325 = vld [vmem:[#allocation9 + $0x30] sm:$0xff]
      %v326 = vld [vmem:[#allocation9 + $0x38] sm:$0xff]
      %v327 = vld [vmem:[%s6] sm:$0x3]
      %v329 = vlaneseq
      %v330 = vshrl.u32 %v329, 7
      %v331 = vsub.s32 0, %v330
      %v332 = vrot.slane %v327, %v331
      %v333 = vlaneseq
      %v334 = vshrl.u32 %v333, 7
      %v335 = vsub.s32 1, %v334
      %v336 = vrot.slane %v327, %v335
      %v340 = vsel %vm103, %v318, 0
      %342 = vmatprep.subr.mxu0 %v320
      %343 = vmatpush1.msra.mxu0 %v319
      %344 = vmatprep.subr.mxu0 %v322
      %345 = vmatpush1.msra.mxu0 %v321
      %346 = vmatprep.subr.mxu0 %v324
      %347 = vmatpush1.msra.mxu0 %v323
      %348 = vmatprep.subr.mxu0 %v326
      %349 = vmatpush1.msra.mxu0 %v325
      %350 = vmatprep.subr.mxu0 0.0
      %351 = vmatpush1.msra.mxu0 0.0
      %352 = vmatprep.subr.mxu0 0.0
      %353 = vmatpush1.msra.mxu0 0.0
      %354 = vmatprep.subr.mxu0 0.0
      %355 = vmatpush1.msra.mxu0 0.0
      %356 = vmatprep.subr.mxu0 0.0
      %357 = vmatpush1.msra.mxu0 0.0
      %358 = vmatprep.subr.mxu0 0.0
      %359 = vmatpush1.msra.mxu0 0.0
      %360 = vmatprep.subr.mxu0 0.0
      %361 = vmatpush1.msra.mxu0 0.0
      %362 = vmatprep.subr.mxu0 0.0
      %363 = vmatpush1.msra.mxu0 0.0
      %364 = vmatprep.subr.mxu0 0.0
      %365 = vmatpush1.msra.mxu0 0.0
      %366 = vmatprep.subr.mxu0 0.0
      %367 = vmatpush1.msra.mxu0 0.0
      %368 = vmatprep.subr.mxu0 0.0
      %369 = vmatpush1.msra.mxu0 0.0
      %370 = vmatprep.subr.mxu0 0.0
      %371 = vmatpush1.msra.mxu0 0.0
      %372 = vmatprep.subr.mxu0 0.0
      %373 = vmatpush1.msra.mxu0 0.0
      %374 = vmatprep.subr.mxu0 0.0
      %375 = vmatpush1.msra.mxu0 0.0
      %376 = vmatprep.subr.mxu0 0.0
      %377 = vmatpush1.msra.mxu0 0.0
      %378 = vmatprep.subr.mxu0 0.0
      %379 = vmatpush1.msra.mxu0 0.0
      %380 = vmatprep.subr.mxu0 0.0
      %381 = vmatpush1.msra.mxu0 0.0
      %382 = vmatprep.subr.mxu0 0.0
      %383 = vmatpush1.msra.mxu0 0.0
      %384 = vmatprep.subr.mxu0 0.0
      %385 = vmatpush1.msra.mxu0 0.0
      %386 = vmatprep.subr.mxu0 0.0
      %387 = vmatpush1.msra.mxu0 0.0
      %388 = vmatprep.subr.mxu0 0.0
      %389 = vmatpush1.msra.mxu0 0.0
      %390 = vmatprep.subr.mxu0 0.0
      %391 = vmatpush1.msra.mxu0 0.0
      %392 = vmatprep.subr.mxu0 0.0
      %393 = vmatpush1.msra.mxu0 0.0
      %394 = vmatprep.subr.mxu0 0.0
      %395 = vmatpush1.msra.mxu0 0.0
      %396 = vmatprep.subr.mxu0 0.0
      %397 = vmatpush1.msra.mxu0 0.0
      %398 = vmatprep.subr.mxu0 0.0
      %399 = vmatpush1.msra.mxu0 0.0
      %400 = vmatprep.subr.mxu0 0.0
      %401 = vmatpush1.msra.mxu0 0.0
      %402 = vmatprep.subr.mxu0 0.0
      %403 = vmatpush1.msra.mxu0 0.0
      %404 = vmatprep.subr.mxu0 0.0
      %405 = vmatpush1.msra.mxu0 0.0
      %406 = vmatprep.mubr.f32.mxu0 0.0
      %407 = vmatmul.mubr.f32.gmra.mrb[0].mxu0 %v340
      %v408 = vpop.f32.mrb[0].mxu0
      %v409 = vadd.f32 %v332, %v408
      %v410 = vpop.f32.mrb[0].mxu0
      %v411 = vadd.f32 %v336, %v410
      %412 = vdwg.mxu0
      %v415 = vcombine.low %v409, %v411
      %v417 = vunpack.c.l.s4 1983009808
      %v418 = vunpack.c.0.s8 %v417
      %v419 = vlaneseq
      %v420 = vshrl.u32 %v419, 7
      %v421 = vsub.s32 %v418, %v420
      %v422 = vrot.slane %v415, %v421
      %424 = vst [vmem:[#allocation14] sm:$0xf] %v422
    $region53: #{tpu_custom_call.1} parent=1 // pred_fallthru
      _
    // Predicated region
    $region54: #{tpu_custom_call.1} parent=1 // pred_check
      _
    $region55: #{tpu_custom_call.1} parent=1 // pred_check_branch
      %426 = sbr.rel (0) target = $region57
    $region56: #{tpu_custom_call.1} parent=1 // pred_region
      %s428 = ssub.s32 32, 32
      %429 = vsyncadd [#allocation5], %s428
      %s431 = sshll.u32 [#allocation11], 4
      %s432 = int_to_ptr.vmem [resolvable:$true] %s431
      %434 = dma.vmem_to_hbm [thread:$0]  %s432, 32, %s7, [#allocation5]
    $region57: #{tpu_custom_call.1} parent=1 // pred_fallthru
      _
    // Predicated region
    $region58: #{tpu_custom_call.1} parent=1 // pred_check
      _
    $region59: #{tpu_custom_call.1} parent=1 // pred_check_branch
      %436 = sbr.rel (0) target = $region61
    $region60: #{tpu_custom_call.1} parent=1 // pred_region
      %s438 = ssub.s32 32, 32
      %439 = vsyncadd [#allocation13], %s438
      %s441 = sshll.u32 [#allocation12], 4
      %s442 = int_to_ptr.vmem [resolvable:$true] %s441
      %444 = dma.vmem_to_hbm [thread:$0]  %s442, 32, %s8, [#allocation13]
    $region61: #{tpu_custom_call.1} parent=1 // pred_fallthru
      _
    // Predicated region
    $region62: #{tpu_custom_call.1} parent=1 // pred_check
      _
    $region63: #{tpu_custom_call.1} parent=1 // pred_check_branch
      %446 = sbr.rel (0) target = $region65
    $region64: #{tpu_custom_call.1} parent=1 // pred_region
      %s448 = ssub.s32 64, 64
      %449 = vsyncadd [#allocation13], %s448
      %s451 = sshll.u32 [#allocation14], 4
      %s452 = int_to_ptr.vmem [resolvable:$true] %s451
      %454 = dma.vmem_to_hbm [thread:$0]  %s452, 64, %s9, [#allocation13]
    $region65: #{tpu_custom_call.1} parent=1 // pred_fallthru
      _
    // Predicated region
    $region66: #{tpu_custom_call.1} parent=1 // pred_check
      _
    $region67: #{tpu_custom_call.1} parent=1 // pred_check_branch
      %456 = sbr.rel (0) target = $region69
    $region68: #{tpu_custom_call.1} parent=1 // pred_region
      %457 = dma.done [#allocation5], 32
    $region69: #{tpu_custom_call.1} parent=1 // pred_fallthru
      _
    // Predicated region
    $region70: #{tpu_custom_call.1} parent=1 // pred_check
      _
    $region71: #{tpu_custom_call.1} parent=1 // pred_check_branch
      %459 = sbr.rel (0) target = $region73
    $region72: #{tpu_custom_call.1} parent=1 // pred_region
      %460 = dma.done [#allocation13], 32
    $region73: #{tpu_custom_call.1} parent=1 // pred_fallthru
      _
    // Predicated region
    $region74: #{tpu_custom_call.1} parent=1 // pred_check
      _
    $region75: #{tpu_custom_call.1} parent=1 // pred_check_branch
      %462 = sbr.rel (0) target = $region77
    $region76: #{tpu_custom_call.1} parent=1 // pred_region
      %463 = dma.done [#allocation13], 64
    $region77: #{tpu_custom_call.1} parent=1 // pred_fallthru
      _
    %464 = vsyncpa [#allocation4], 1
    %465 = vsyncpa [#allocation7], 1
    %466 = vsyncpa [#allocation10], 1
    %467 = vsyncpa [#allocation5], 1
    %468 = vsyncpa [#allocation13], 1

</llo_original>
